<compile_context>
chip_gen: v6e
topology: v6e:2x2x1
jax: 0.10.0
libtpu: 0.0.40
codegen_flags: <defaults>
</compile_context>

<pallas_src>
import math
from functools import partial

import jax
import jax.numpy as jnp
from jax.experimental import pallas as pl
from jax.experimental.pallas import tpu as pltpu

# ---------------- module hyper-parameters (synthetic, deterministic) ----------------
B = 2            # batch (== len(latent_goal))
T = 8            # action_window_size
A = 8            # out_features
S = 32           # perceptual embedding dim
G = 32           # latent goal dim
H = 128          # hidden width of the synthetic inner denoising model
OBS_WINDOW = 1   # obs_window_size

SIGMA_DATA = 0.5
SIGMA_MIN = 1e-3
SIGMA_MAX = 80.0
SAMPLING_STEPS = 10          # forward(inference=False) uses 10 steps
SAMPLER_TYPE = "euler"       # sample_euler with s_churn = 0
NOISE_SCHEDULER = "exponential"


# ---------------- Pallas kernel: fully fused EDM euler sampling loop ----------------
def fused_euler_sampler_kernel(coef_ref,   # SMEM (4*STEPS,) [c_in, c_noise, a_mul, b_mul] per step
                               x_ref,      # VMEM (B*T, A)   initial noise * sigma_max
                               sg_ref,     # VMEM (B*T, S+G) [state ; goal], replicated over T
                               wsg_ref,    # VMEM (S+G, H)   [w1s ; w1g]
                               w1x_ref,    # VMEM (A, H)
                               w1n_ref,    # VMEM (1, H)     sigma-embedding row
                               b1_ref,     # VMEM (1, H)
                               w2_ref,     # VMEM (H, A)
                               b2_ref,     # VMEM (1, A)
                               out_ref):   # VMEM (B*T, A)
    # ---- step-invariant part of layer 1: computed ONCE per generation ----
    base = jnp.dot(sg_ref[...], wsg_ref[...],
                   preferred_element_type=jnp.float32) + b1_ref[...]      # (B*T, H)

    w1x = w1x_ref[...]
    w1n = w1n_ref[...]
    w2 = w2_ref[...]
    b2 = b2_ref[...]

    x = x_ref[...]                                                        # (B*T, A)

    # ---- fused sampling loop (small static trip count -> unrolled at trace time,
    #       every SMEM coefficient read is a static scalar load) ----
    for i in range(SAMPLING_STEPS):
        c_in = coef_ref[4 * i + 0]
        c_noise = coef_ref[4 * i + 1]
        a_mul = coef_ref[4 * i + 2]   # = 1 + (1 - c_skip) * dt / sigma
        b_mul = coef_ref[4 * i + 3]   # = c_out * dt / sigma

        h = jnp.dot(x * c_in, w1x, preferred_element_type=jnp.float32)    # (B*T, H)
        h = jnp.maximum(h + base + c_noise * w1n, 0.0)                    # ReLU
        net = jnp.dot(h, w2, preferred_element_type=jnp.float32) + b2     # (B*T, A)

        # Euler update with EDM preconditioning folded into 2 scalar FMAs:
        #   denoised = c_skip*x + c_out*net ; d = (x - denoised)/sigma
        #   x <- x + d*(sigma_next - sigma)  ==  a_mul*x - b_mul*net
        x = a_mul * x - b_mul * net

    out_ref[...] = x.astype(out_ref.dtype)   # single final store


def _vmem_spec():
    return pl.BlockSpec(memory_space=pltpu.MemorySpace.VMEM)


def _smem_spec():
    return pl.BlockSpec(memory_space=pltpu.MemorySpace.SMEM)


# ---------------- glue: noise schedule, coefficient folding, forward ----------------
def get_sigmas_exponential(n, sigma_min, sigma_max):
    sigmas = jnp.exp(jnp.linspace(math.log(sigma_max), math.log(sigma_min), n,
                                  dtype=jnp.float32))
    return jnp.concatenate([sigmas, jnp.zeros((1,), dtype=jnp.float32)])


def _step_coefficients(sigmas):
    """Exact per-step scalars: [c_in, c_noise, a_mul, b_mul] flattened to (4*STEPS,)."""
    sig = sigmas[:SAMPLING_STEPS]
    sig_next = sigmas[1:SAMPLING_STEPS + 1]
    sd2 = SIGMA_DATA * SIGMA_DATA
    denom = sig * sig + sd2
    sqrt_denom = jnp.sqrt(denom)
    c_in = 1.0 / sqrt_denom
    c_skip = sd2 / denom
    c_out = sig * SIGMA_DATA / sqrt_denom
    c_noise = jnp.log(sig) * 0.25
    dt = sig_next - sig
    a_mul = 1.0 + (1.0 - c_skip) * dt / sig
    b_mul = c_out * dt / sig
    return jnp.stack([c_in, c_noise, a_mul, b_mul], axis=1).reshape(-1).astype(jnp.float32)


def diffusion_decoder_forward(perceptual_emb, latent_goal, params, noise_key):
    """Mirrors DiffusionDecoder.forward(..., inference=False) semantics.

    perceptual_emb : (B, 1, S)  (obs_window_size == 1 -> input_state = perceptual_emb)
    latent_goal    : (B, 1, G)  (3-D, so latent_goal_length = B)
    returns (actions (B, T, A), None)
    """
    state = perceptual_emb.reshape(B, S).astype(jnp.float32)
    goal = latent_goal.reshape(B, G).astype(jnp.float32)

    sigmas = get_sigmas_exponential(SAMPLING_STEPS, SIGMA_MIN, SIGMA_MAX)
    coefs = _step_coefficients(sigmas)                       # (4*STEPS,) -> SMEM

    # x = randn(B, T, A) * sigma_max, flattened to (B*T, A) for plain 2-D matmuls
    x = jax.random.normal(noise_key, (B, T, A), dtype=jnp.float32) * SIGMA_MAX
    x2d = x.reshape(B * T, A)

    # step-invariant inputs: concat [state ; goal] once and replicate over the T rows
    sg = jnp.concatenate([state, goal], axis=-1)             # (B, S+G)
    sg_rep = jnp.broadcast_to(sg[:, None, :], (B, T, S + G)).reshape(B * T, S + G)
    wsg = jnp.concatenate([params["w1s"], params["w1g"]], axis=0)   # (S+G, H)

    out2d = pl.pallas_call(
        fused_euler_sampler_kernel,
        out_shape=jax.ShapeDtypeStruct((B * T, A), jnp.float32),
        in_specs=[
            _smem_spec(),   # coefficient table
            _vmem_spec(),   # x
            _vmem_spec(),   # [state ; goal] replicated
            _vmem_spec(),   # [w1s ; w1g]
            _vmem_spec(),   # w1x
            _vmem_spec(),   # w1n
            _vmem_spec(),   # b1
            _vmem_spec(),   # w2
            _vmem_spec(),   # b2
        ],
        out_specs=_vmem_spec(),
        # No grid / no blocking: total resident footprint < 100 KB, so whole-array
        # VMEM blocks avoid any per-step pipeline overhead on v5e/v6e/v7x alike.
    )(coefs, x2d, sg_rep, wsg,
      params["w1x"], params["w1n"], params["b1"], params["w2"], params["b2"])

    return out2d.reshape(B, T, A), None


# ---------------- pure-JAX reference (original un-folded formulation) ----------------
def _reference_forward(perceptual_emb, latent_goal, params, noise_key):
    state = perceptual_emb.reshape(B, S)
    goal = latent_goal.reshape(B, G)
    sigmas = get_sigmas_exponential(SAMPLING_STEPS, SIGMA_MIN, SIGMA_MAX)
    x = jax.random.normal(noise_key, (B, T, A), dtype=jnp.float32) * SIGMA_MAX
    sd2 = SIGMA_DATA ** 2
    for i in range(SAMPLING_STEPS):
        sigma, sigma_next = sigmas[i], sigmas[i + 1]
        denom = sigma * sigma + sd2
        c_in = 1.0 / jnp.sqrt(denom)
        c_skip = sd2 / denom
        c_out = sigma * SIGMA_DATA / jnp.sqrt(denom)
        c_noise = jnp.log(sigma) / 4.0
        h = (jnp.einsum("bta,ah->bth", x * c_in, params["w1x"])
             + (state @ params["w1s"])[:, None, :]
             + (goal @ params["w1g"])[:, None, :]
             + c_noise * params["w1n"][None, :, :]
             + params["b1"][None, :, :])
        h = jnp.maximum(h, 0.0)
        net = jnp.einsum("bth,ha->bta", h, params["w2"]) + params["b2"][None, :, :]
        denoised = c_skip * x + c_out * net
        d = (x - denoised) / sigma
        x = x + d * (sigma_next - sigma)
    return x


# ---------------- parameter init (deterministic, synthetic) ----------------
def init_params(key):
    ks = jax.random.split(key, 7)
    scale = 0.02
    return {
        "w1x": scale * jax.random.normal(ks[0], (A, H), dtype=jnp.float32),
        "w1s": scale * jax.random.normal(ks[1], (S, H), dtype=jnp.float32),
        "w1g": scale * jax.random.normal(ks[2], (G, H), dtype=jnp.float32),
        "w1n": scale * jax.random.normal(ks[3], (1, H), dtype=jnp.float32),
        "b1": jnp.zeros((1, H), dtype=jnp.float32),
        "w2": scale * jax.random.normal(ks[4], (H, A), dtype=jnp.float32),
        "b2": jnp.zeros((1, A), dtype=jnp.float32),
    }


if __name__ == "__main__":
    root = jax.random.PRNGKey(0)
    k_param, k_state, k_goal, k_noise = jax.random.split(root, 4)

    params = init_params(k_param)
    perceptual_emb = jax.random.normal(k_state, (B, OBS_WINDOW, S), dtype=jnp.float32)
    latent_goal = jax.random.normal(k_goal, (B, 1, G), dtype=jnp.float32)

    fwd = jax.jit(partial(diffusion_decoder_forward, params=params, noise_key=k_noise))
    actions, _ = fwd(perceptual_emb, latent_goal)
    actions = jax.block_until_ready(actions)

    ref = _reference_forward(perceptual_emb, latent_goal, params, k_noise)
    assert actions.shape == (B, T, A)
    assert jnp.allclose(actions, ref, atol=1e-4, rtol=1e-4), "mismatch vs JAX reference"

    # TODO(synk): alternative samplers (dpm, lms, ancestral, ...), dict-typed goals,
    # obs_window_size > 1 context concatenation, and the training-time loss /
    # sample-density paths are not implemented; only the 'euler' + 'exponential'
    # inference configuration used by forward() is covered.
    print("KERNEL_OK")
</pallas_src>

<mosaic_0001>
module attributes {stable_mosaic.version = 11 : i64} {
  func.func @fused_euler_sampler_kernel(%arg0: memref<40xf32, #tpu.memory_space<smem>>, %arg1: memref<16x8xf32, #tpu.memory_space<vmem>>, %arg2: memref<16x64xf32, #tpu.memory_space<vmem>>, %arg3: memref<64x128xf32, #tpu.memory_space<vmem>>, %arg4: memref<8x128xf32, #tpu.memory_space<vmem>>, %arg5: memref<1x128xf32, #tpu.memory_space<vmem>>, %arg6: memref<1x128xf32, #tpu.memory_space<vmem>>, %arg7: memref<128x8xf32, #tpu.memory_space<vmem>>, %arg8: memref<1x8xf32, #tpu.memory_space<vmem>>, %arg9: memref<16x8xf32, #tpu.memory_space<vmem>>) attributes {dimension_semantics = [], scalar_prefetch = 0 : i64, scratch_operands = 0 : i64, tpu.core_type = #tpu.core_type<tc>} {
    %c0 = arith.constant 0 : index
    %c0_0 = arith.constant 0 : index
    %0 = vector.load %arg2[%c0, %c0_0] : memref<16x64xf32, #tpu.memory_space<vmem>>, vector<16x64xf32>
    %c0_1 = arith.constant 0 : index
    %c0_2 = arith.constant 0 : index
    %1 = vector.load %arg3[%c0_1, %c0_2] : memref<64x128xf32, #tpu.memory_space<vmem>>, vector<64x128xf32>
    %cst = arith.constant dense<0.000000e+00> : vector<16x128xf32>
    %2 = tpu.matmul %0, %1, %cst {dimension_numbers = #tpu.dot_dimension_numbers<[1], [0], [0], [1], [0, 0, 1, 1], [], []>} : vector<16x64xf32>, vector<64x128xf32>, vector<16x128xf32> -> vector<16x128xf32>
    %c0_3 = arith.constant 0 : index
    %c0_4 = arith.constant 0 : index
    %3 = vector.load %arg6[%c0_3, %c0_4] : memref<1x128xf32, #tpu.memory_space<vmem>>, vector<1x128xf32>
    %4 = vector.broadcast %3 : vector<1x128xf32> to vector<16x128xf32>
    %5 = arith.addf %2, %4 : vector<16x128xf32>
    %c0_5 = arith.constant 0 : index
    %c0_6 = arith.constant 0 : index
    %6 = vector.load %arg4[%c0_5, %c0_6] : memref<8x128xf32, #tpu.memory_space<vmem>>, vector<8x128xf32>
    %c0_7 = arith.constant 0 : index
    %c0_8 = arith.constant 0 : index
    %7 = vector.load %arg5[%c0_7, %c0_8] : memref<1x128xf32, #tpu.memory_space<vmem>>, vector<1x128xf32>
    %c0_9 = arith.constant 0 : index
    %c0_10 = arith.constant 0 : index
    %8 = vector.load %arg7[%c0_9, %c0_10] : memref<128x8xf32, #tpu.memory_space<vmem>>, vector<128x8xf32>
    %c0_11 = arith.constant 0 : index
    %c0_12 = arith.constant 0 : index
    %9 = vector.load %arg8[%c0_11, %c0_12] : memref<1x8xf32, #tpu.memory_space<vmem>>, vector<1x8xf32>
    %c0_13 = arith.constant 0 : index
    %c0_14 = arith.constant 0 : index
    %10 = vector.load %arg1[%c0_13, %c0_14] : memref<16x8xf32, #tpu.memory_space<vmem>>, vector<16x8xf32>
    %c0_15 = arith.constant 0 : index
    %11 = memref.load %arg0[%c0_15] : memref<40xf32, #tpu.memory_space<smem>>
    %c1 = arith.constant 1 : index
    %12 = memref.load %arg0[%c1] : memref<40xf32, #tpu.memory_space<smem>>
    %c2 = arith.constant 2 : index
    %13 = memref.load %arg0[%c2] : memref<40xf32, #tpu.memory_space<smem>>
    %c3 = arith.constant 3 : index
    %14 = memref.load %arg0[%c3] : memref<40xf32, #tpu.memory_space<smem>>
    %15 = vector.broadcast %11 : f32 to vector<16x8xf32>
    %16 = arith.mulf %10, %15 : vector<16x8xf32>
    %cst_16 = arith.constant dense<0.000000e+00> : vector<16x128xf32>
    %17 = tpu.matmul %16, %6, %cst_16 {dimension_numbers = #tpu.dot_dimension_numbers<[1], [0], [0], [1], [0, 0, 1, 1], [], []>} : vector<16x8xf32>, vector<8x128xf32>, vector<16x128xf32> -> vector<16x128xf32>
    %18 = arith.addf %17, %5 : vector<16x128xf32>
    %19 = vector.broadcast %12 : f32 to vector<1x128xf32>
    %20 = arith.mulf %19, %7 : vector<1x128xf32>
    %21 = vector.broadcast %20 : vector<1x128xf32> to vector<16x128xf32>
    %22 = arith.addf %18, %21 : vector<16x128xf32>
    %cst_17 = arith.constant 0.000000e+00 : f32
    %23 = vector.broadcast %cst_17 : f32 to vector<16x128xf32>
    %24 = arith.maximumf %22, %23 : vector<16x128xf32>
    %cst_18 = arith.constant dense<0.000000e+00> : vector<16x8xf32>
    %25 = tpu.matmul %24, %8, %cst_18 {dimension_numbers = #tpu.dot_dimension_numbers<[1], [0], [0], [1], [0, 0, 1, 1], [], []>} : vector<16x128xf32>, vector<128x8xf32>, vector<16x8xf32> -> vector<16x8xf32>
    %26 = vector.broadcast %9 : vector<1x8xf32> to vector<16x8xf32>
    %27 = arith.addf %25, %26 : vector<16x8xf32>
    %28 = vector.broadcast %13 : f32 to vector<16x8xf32>
    %29 = arith.mulf %28, %10 : vector<16x8xf32>
    %30 = vector.broadcast %14 : f32 to vector<16x8xf32>
    %31 = arith.mulf %30, %27 : vector<16x8xf32>
    %32 = arith.subf %29, %31 : vector<16x8xf32>
    %c4 = arith.constant 4 : index
    %33 = memref.load %arg0[%c4] : memref<40xf32, #tpu.memory_space<smem>>
    %c5 = arith.constant 5 : index
    %34 = memref.load %arg0[%c5] : memref<40xf32, #tpu.memory_space<smem>>
    %c6 = arith.constant 6 : index
    %35 = memref.load %arg0[%c6] : memref<40xf32, #tpu.memory_space<smem>>
    %c7 = arith.constant 7 : index
    %36 = memref.load %arg0[%c7] : memref<40xf32, #tpu.memory_space<smem>>
    %37 = vector.broadcast %33 : f32 to vector<16x8xf32>
    %38 = arith.mulf %32, %37 : vector<16x8xf32>
    %cst_19 = arith.constant dense<0.000000e+00> : vector<16x128xf32>
    %39 = tpu.matmul %38, %6, %cst_19 {dimension_numbers = #tpu.dot_dimension_numbers<[1], [0], [0], [1], [0, 0, 1, 1], [], []>} : vector<16x8xf32>, vector<8x128xf32>, vector<16x128xf32> -> vector<16x128xf32>
    %40 = arith.addf %39, %5 : vector<16x128xf32>
    %41 = vector.broadcast %34 : f32 to vector<1x128xf32>
    %42 = arith.mulf %41, %7 : vector<1x128xf32>
    %43 = vector.broadcast %42 : vector<1x128xf32> to vector<16x128xf32>
    %44 = arith.addf %40, %43 : vector<16x128xf32>
    %cst_20 = arith.constant 0.000000e+00 : f32
    %45 = vector.broadcast %cst_20 : f32 to vector<16x128xf32>
    %46 = arith.maximumf %44, %45 : vector<16x128xf32>
    %cst_21 = arith.constant dense<0.000000e+00> : vector<16x8xf32>
    %47 = tpu.matmul %46, %8, %cst_21 {dimension_numbers = #tpu.dot_dimension_numbers<[1], [0], [0], [1], [0, 0, 1, 1], [], []>} : vector<16x128xf32>, vector<128x8xf32>, vector<16x8xf32> -> vector<16x8xf32>
    %48 = vector.broadcast %9 : vector<1x8xf32> to vector<16x8xf32>
    %49 = arith.addf %47, %48 : vector<16x8xf32>
    %50 = vector.broadcast %35 : f32 to vector<16x8xf32>
    %51 = arith.mulf %50, %32 : vector<16x8xf32>
    %52 = vector.broadcast %36 : f32 to vector<16x8xf32>
    %53 = arith.mulf %52, %49 : vector<16x8xf32>
    %54 = arith.subf %51, %53 : vector<16x8xf32>
    %c8 = arith.constant 8 : index
    %55 = memref.load %arg0[%c8] : memref<40xf32, #tpu.memory_space<smem>>
    %c9 = arith.constant 9 : index
    %56 = memref.load %arg0[%c9] : memref<40xf32, #tpu.memory_space<smem>>
    %c10 = arith.constant 10 : index
    %57 = memref.load %arg0[%c10] : memref<40xf32, #tpu.memory_space<smem>>
    %c11 = arith.constant 11 : index
    %58 = memref.load %arg0[%c11] : memref<40xf32, #tpu.memory_space<smem>>
    %59 = vector.broadcast %55 : f32 to vector<16x8xf32>
    %60 = arith.mulf %54, %59 : vector<16x8xf32>
    %cst_22 = arith.constant dense<0.000000e+00> : vector<16x128xf32>
    %61 = tpu.matmul %60, %6, %cst_22 {dimension_numbers = #tpu.dot_dimension_numbers<[1], [0], [0], [1], [0, 0, 1, 1], [], []>} : vector<16x8xf32>, vector<8x128xf32>, vector<16x128xf32> -> vector<16x128xf32>
    %62 = arith.addf %61, %5 : vector<16x128xf32>
    %63 = vector.broadcast %56 : f32 to vector<1x128xf32>
    %64 = arith.mulf %63, %7 : vector<1x128xf32>
    %65 = vector.broadcast %64 : vector<1x128xf32> to vector<16x128xf32>
    %66 = arith.addf %62, %65 : vector<16x128xf32>
    %cst_23 = arith.constant 0.000000e+00 : f32
    %67 = vector.broadcast %cst_23 : f32 to vector<16x128xf32>
    %68 = arith.maximumf %66, %67 : vector<16x128xf32>
    %cst_24 = arith.constant dense<0.000000e+00> : vector<16x8xf32>
    %69 = tpu.matmul %68, %8, %cst_24 {dimension_numbers = #tpu.dot_dimension_numbers<[1], [0], [0], [1], [0, 0, 1, 1], [], []>} : vector<16x128xf32>, vector<128x8xf32>, vector<16x8xf32> -> vector<16x8xf32>
    %70 = vector.broadcast %9 : vector<1x8xf32> to vector<16x8xf32>
    %71 = arith.addf %69, %70 : vector<16x8xf32>
    %72 = vector.broadcast %57 : f32 to vector<16x8xf32>
    %73 = arith.mulf %72, %54 : vector<16x8xf32>
    %74 = vector.broadcast %58 : f32 to vector<16x8xf32>
    %75 = arith.mulf %74, %71 : vector<16x8xf32>
    %76 = arith.subf %73, %75 : vector<16x8xf32>
    %c12 = arith.constant 12 : index
    %77 = memref.load %arg0[%c12] : memref<40xf32, #tpu.memory_space<smem>>
    %c13 = arith.constant 13 : index
    %78 = memref.load %arg0[%c13] : memref<40xf32, #tpu.memory_space<smem>>
    %c14 = arith.constant 14 : index
    %79 = memref.load %arg0[%c14] : memref<40xf32, #tpu.memory_space<smem>>
    %c15 = arith.constant 15 : index
    %80 = memref.load %arg0[%c15] : memref<40xf32, #tpu.memory_space<smem>>
    %81 = vector.broadcast %77 : f32 to vector<16x8xf32>
    %82 = arith.mulf %76, %81 : vector<16x8xf32>
    %cst_25 = arith.constant dense<0.000000e+00> : vector<16x128xf32>
    %83 = tpu.matmul %82, %6, %cst_25 {dimension_numbers = #tpu.dot_dimension_numbers<[1], [0], [0], [1], [0, 0, 1, 1], [], []>} : vector<16x8xf32>, vector<8x128xf32>, vector<16x128xf32> -> vector<16x128xf32>
    %84 = arith.addf %83, %5 : vector<16x128xf32>
    %85 = vector.broadcast %78 : f32 to vector<1x128xf32>
    %86 = arith.mulf %85, %7 : vector<1x128xf32>
    %87 = vector.broadcast %86 : vector<1x128xf32> to vector<16x128xf32>
    %88 = arith.addf %84, %87 : vector<16x128xf32>
    %cst_26 = arith.constant 0.000000e+00 : f32
    %89 = vector.broadcast %cst_26 : f32 to vector<16x128xf32>
    %90 = arith.maximumf %88, %89 : vector<16x128xf32>
    %cst_27 = arith.constant dense<0.000000e+00> : vector<16x8xf32>
    %91 = tpu.matmul %90, %8, %cst_27 {dimension_numbers = #tpu.dot_dimension_numbers<[1], [0], [0], [1], [0, 0, 1, 1], [], []>} : vector<16x128xf32>, vector<128x8xf32>, vector<16x8xf32> -> vector<16x8xf32>
    %92 = vector.broadcast %9 : vector<1x8xf32> to vector<16x8xf32>
    %93 = arith.addf %91, %92 : vector<16x8xf32>
    %94 = vector.broadcast %79 : f32 to vector<16x8xf32>
    %95 = arith.mulf %94, %76 : vector<16x8xf32>
    %96 = vector.broadcast %80 : f32 to vector<16x8xf32>
    %97 = arith.mulf %96, %93 : vector<16x8xf32>
    %98 = arith.subf %95, %97 : vector<16x8xf32>
    %c16 = arith.constant 16 : index
    %99 = memref.load %arg0[%c16] : memref<40xf32, #tpu.memory_space<smem>>
    %c17 = arith.constant 17 : index
    %100 = memref.load %arg0[%c17] : memref<40xf32, #tpu.memory_space<smem>>
    %c18 = arith.constant 18 : index
    %101 = memref.load %arg0[%c18] : memref<40xf32, #tpu.memory_space<smem>>
    %c19 = arith.constant 19 : index
    %102 = memref.load %arg0[%c19] : memref<40xf32, #tpu.memory_space<smem>>
    %103 = vector.broadcast %99 : f32 to vector<16x8xf32>
    %104 = arith.mulf %98, %103 : vector<16x8xf32>
    %cst_28 = arith.constant dense<0.000000e+00> : vector<16x128xf32>
    %105 = tpu.matmul %104, %6, %cst_28 {dimension_numbers = #tpu.dot_dimension_numbers<[1], [0], [0], [1], [0, 0, 1, 1], [], []>} : vector<16x8xf32>, vector<8x128xf32>, vector<16x128xf32> -> vector<16x128xf32>
    %106 = arith.addf %105, %5 : vector<16x128xf32>
    %107 = vector.broadcast %100 : f32 to vector<1x128xf32>
    %108 = arith.mulf %107, %7 : vector<1x128xf32>
    %109 = vector.broadcast %108 : vector<1x128xf32> to vector<16x128xf32>
    %110 = arith.addf %106, %109 : vector<16x128xf32>
    %cst_29 = arith.constant 0.000000e+00 : f32
    %111 = vector.broadcast %cst_29 : f32 to vector<16x128xf32>
    %112 = arith.maximumf %110, %111 : vector<16x128xf32>
    %cst_30 = arith.constant dense<0.000000e+00> : vector<16x8xf32>
    %113 = tpu.matmul %112, %8, %cst_30 {dimension_numbers = #tpu.dot_dimension_numbers<[1], [0], [0], [1], [0, 0, 1, 1], [], []>} : vector<16x128xf32>, vector<128x8xf32>, vector<16x8xf32> -> vector<16x8xf32>
    %114 = vector.broadcast %9 : vector<1x8xf32> to vector<16x8xf32>
    %115 = arith.addf %113, %114 : vector<16x8xf32>
    %116 = vector.broadcast %101 : f32 to vector<16x8xf32>
    %117 = arith.mulf %116, %98 : vector<16x8xf32>
    %118 = vector.broadcast %102 : f32 to vector<16x8xf32>
    %119 = arith.mulf %118, %115 : vector<16x8xf32>
    %120 = arith.subf %117, %119 : vector<16x8xf32>
    %c20 = arith.constant 20 : index
    %121 = memref.load %arg0[%c20] : memref<40xf32, #tpu.memory_space<smem>>
    %c21 = arith.constant 21 : index
    %122 = memref.load %arg0[%c21] : memref<40xf32, #tpu.memory_space<smem>>
    %c22 = arith.constant 22 : index
    %123 = memref.load %arg0[%c22] : memref<40xf32, #tpu.memory_space<smem>>
    %c23 = arith.constant 23 : index
    %124 = memref.load %arg0[%c23] : memref<40xf32, #tpu.memory_space<smem>>
    %125 = vector.broadcast %121 : f32 to vector<16x8xf32>
    %126 = arith.mulf %120, %125 : vector<16x8xf32>
    %cst_31 = arith.constant dense<0.000000e+00> : vector<16x128xf32>
    %127 = tpu.matmul %126, %6, %cst_31 {dimension_numbers = #tpu.dot_dimension_numbers<[1], [0], [0], [1], [0, 0, 1, 1], [], []>} : vector<16x8xf32>, vector<8x128xf32>, vector<16x128xf32> -> vector<16x128xf32>
    %128 = arith.addf %127, %5 : vector<16x128xf32>
    %129 = vector.broadcast %122 : f32 to vector<1x128xf32>
    %130 = arith.mulf %129, %7 : vector<1x128xf32>
    %131 = vector.broadcast %130 : vector<1x128xf32> to vector<16x128xf32>
    %132 = arith.addf %128, %131 : vector<16x128xf32>
    %cst_32 = arith.constant 0.000000e+00 : f32
    %133 = vector.broadcast %cst_32 : f32 to vector<16x128xf32>
    %134 = arith.maximumf %132, %133 : vector<16x128xf32>
    %cst_33 = arith.constant dense<0.000000e+00> : vector<16x8xf32>
    %135 = tpu.matmul %134, %8, %cst_33 {dimension_numbers = #tpu.dot_dimension_numbers<[1], [0], [0], [1], [0, 0, 1, 1], [], []>} : vector<16x128xf32>, vector<128x8xf32>, vector<16x8xf32> -> vector<16x8xf32>
    %136 = vector.broadcast %9 : vector<1x8xf32> to vector<16x8xf32>
    %137 = arith.addf %135, %136 : vector<16x8xf32>
    %138 = vector.broadcast %123 : f32 to vector<16x8xf32>
    %139 = arith.mulf %138, %120 : vector<16x8xf32>
    %140 = vector.broadcast %124 : f32 to vector<16x8xf32>
    %141 = arith.mulf %140, %137 : vector<16x8xf32>
    %142 = arith.subf %139, %141 : vector<16x8xf32>
    %c24 = arith.constant 24 : index
    %143 = memref.load %arg0[%c24] : memref<40xf32, #tpu.memory_space<smem>>
    %c25 = arith.constant 25 : index
    %144 = memref.load %arg0[%c25] : memref<40xf32, #tpu.memory_space<smem>>
    %c26 = arith.constant 26 : index
    %145 = memref.load %arg0[%c26] : memref<40xf32, #tpu.memory_space<smem>>
    %c27 = arith.constant 27 : index
    %146 = memref.load %arg0[%c27] : memref<40xf32, #tpu.memory_space<smem>>
    %147 = vector.broadcast %143 : f32 to vector<16x8xf32>
    %148 = arith.mulf %142, %147 : vector<16x8xf32>
    %cst_34 = arith.constant dense<0.000000e+00> : vector<16x128xf32>
    %149 = tpu.matmul %148, %6, %cst_34 {dimension_numbers = #tpu.dot_dimension_numbers<[1], [0], [0], [1], [0, 0, 1, 1], [], []>} : vector<16x8xf32>, vector<8x128xf32>, vector<16x128xf32> -> vector<16x128xf32>
    %150 = arith.addf %149, %5 : vector<16x128xf32>
    %151 = vector.broadcast %144 : f32 to vector<1x128xf32>
    %152 = arith.mulf %151, %7 : vector<1x128xf32>
    %153 = vector.broadcast %152 : vector<1x128xf32> to vector<16x128xf32>
    %154 = arith.addf %150, %153 : vector<16x128xf32>
    %cst_35 = arith.constant 0.000000e+00 : f32
    %155 = vector.broadcast %cst_35 : f32 to vector<16x128xf32>
    %156 = arith.maximumf %154, %155 : vector<16x128xf32>
    %cst_36 = arith.constant dense<0.000000e+00> : vector<16x8xf32>
    %157 = tpu.matmul %156, %8, %cst_36 {dimension_numbers = #tpu.dot_dimension_numbers<[1], [0], [0], [1], [0, 0, 1, 1], [], []>} : vector<16x128xf32>, vector<128x8xf32>, vector<16x8xf32> -> vector<16x8xf32>
    %158 = vector.broadcast %9 : vector<1x8xf32> to vector<16x8xf32>
    %159 = arith.addf %157, %158 : vector<16x8xf32>
    %160 = vector.broadcast %145 : f32 to vector<16x8xf32>
    %161 = arith.mulf %160, %142 : vector<16x8xf32>
    %162 = vector.broadcast %146 : f32 to vector<16x8xf32>
    %163 = arith.mulf %162, %159 : vector<16x8xf32>
    %164 = arith.subf %161, %163 : vector<16x8xf32>
    %c28 = arith.constant 28 : index
    %165 = memref.load %arg0[%c28] : memref<40xf32, #tpu.memory_space<smem>>
    %c29 = arith.constant 29 : index
    %166 = memref.load %arg0[%c29] : memref<40xf32, #tpu.memory_space<smem>>
    %c30 = arith.constant 30 : index
    %167 = memref.load %arg0[%c30] : memref<40xf32, #tpu.memory_space<smem>>
    %c31 = arith.constant 31 : index
    %168 = memref.load %arg0[%c31] : memref<40xf32, #tpu.memory_space<smem>>
    %169 = vector.broadcast %165 : f32 to vector<16x8xf32>
    %170 = arith.mulf %164, %169 : vector<16x8xf32>
    %cst_37 = arith.constant dense<0.000000e+00> : vector<16x128xf32>
    %171 = tpu.matmul %170, %6, %cst_37 {dimension_numbers = #tpu.dot_dimension_numbers<[1], [0], [0], [1], [0, 0, 1, 1], [], []>} : vector<16x8xf32>, vector<8x128xf32>, vector<16x128xf32> -> vector<16x128xf32>
    %172 = arith.addf %171, %5 : vector<16x128xf32>
    %173 = vector.broadcast %166 : f32 to vector<1x128xf32>
    %174 = arith.mulf %173, %7 : vector<1x128xf32>
    %175 = vector.broadcast %174 : vector<1x128xf32> to vector<16x128xf32>
    %176 = arith.addf %172, %175 : vector<16x128xf32>
    %cst_38 = arith.constant 0.000000e+00 : f32
    %177 = vector.broadcast %cst_38 : f32 to vector<16x128xf32>
    %178 = arith.maximumf %176, %177 : vector<16x128xf32>
    %cst_39 = arith.constant dense<0.000000e+00> : vector<16x8xf32>
    %179 = tpu.matmul %178, %8, %cst_39 {dimension_numbers = #tpu.dot_dimension_numbers<[1], [0], [0], [1], [0, 0, 1, 1], [], []>} : vector<16x128xf32>, vector<128x8xf32>, vector<16x8xf32> -> vector<16x8xf32>
    %180 = vector.broadcast %9 : vector<1x8xf32> to vector<16x8xf32>
    %181 = arith.addf %179, %180 : vector<16x8xf32>
    %182 = vector.broadcast %167 : f32 to vector<16x8xf32>
    %183 = arith.mulf %182, %164 : vector<16x8xf32>
    %184 = vector.broadcast %168 : f32 to vector<16x8xf32>
    %185 = arith.mulf %184, %181 : vector<16x8xf32>
    %186 = arith.subf %183, %185 : vector<16x8xf32>
    %c32 = arith.constant 32 : index
    %187 = memref.load %arg0[%c32] : memref<40xf32, #tpu.memory_space<smem>>
    %c33 = arith.constant 33 : index
    %188 = memref.load %arg0[%c33] : memref<40xf32, #tpu.memory_space<smem>>
    %c34 = arith.constant 34 : index
    %189 = memref.load %arg0[%c34] : memref<40xf32, #tpu.memory_space<smem>>
    %c35 = arith.constant 35 : index
    %190 = memref.load %arg0[%c35] : memref<40xf32, #tpu.memory_space<smem>>
    %191 = vector.broadcast %187 : f32 to vector<16x8xf32>
    %192 = arith.mulf %186, %191 : vector<16x8xf32>
    %cst_40 = arith.constant dense<0.000000e+00> : vector<16x128xf32>
    %193 = tpu.matmul %192, %6, %cst_40 {dimension_numbers = #tpu.dot_dimension_numbers<[1], [0], [0], [1], [0, 0, 1, 1], [], []>} : vector<16x8xf32>, vector<8x128xf32>, vector<16x128xf32> -> vector<16x128xf32>
    %194 = arith.addf %193, %5 : vector<16x128xf32>
    %195 = vector.broadcast %188 : f32 to vector<1x128xf32>
    %196 = arith.mulf %195, %7 : vector<1x128xf32>
    %197 = vector.broadcast %196 : vector<1x128xf32> to vector<16x128xf32>
    %198 = arith.addf %194, %197 : vector<16x128xf32>
    %cst_41 = arith.constant 0.000000e+00 : f32
    %199 = vector.broadcast %cst_41 : f32 to vector<16x128xf32>
    %200 = arith.maximumf %198, %199 : vector<16x128xf32>
    %cst_42 = arith.constant dense<0.000000e+00> : vector<16x8xf32>
    %201 = tpu.matmul %200, %8, %cst_42 {dimension_numbers = #tpu.dot_dimension_numbers<[1], [0], [0], [1], [0, 0, 1, 1], [], []>} : vector<16x128xf32>, vector<128x8xf32>, vector<16x8xf32> -> vector<16x8xf32>
    %202 = vector.broadcast %9 : vector<1x8xf32> to vector<16x8xf32>
    %203 = arith.addf %201, %202 : vector<16x8xf32>
    %204 = vector.broadcast %189 : f32 to vector<16x8xf32>
    %205 = arith.mulf %204, %186 : vector<16x8xf32>
    %206 = vector.broadcast %190 : f32 to vector<16x8xf32>
    %207 = arith.mulf %206, %203 : vector<16x8xf32>
    %208 = arith.subf %205, %207 : vector<16x8xf32>
    %c36 = arith.constant 36 : index
    %209 = memref.load %arg0[%c36] : memref<40xf32, #tpu.memory_space<smem>>
    %c37 = arith.constant 37 : index
    %210 = memref.load %arg0[%c37] : memref<40xf32, #tpu.memory_space<smem>>
    %c38 = arith.constant 38 : index
    %211 = memref.load %arg0[%c38] : memref<40xf32, #tpu.memory_space<smem>>
    %c39 = arith.constant 39 : index
    %212 = memref.load %arg0[%c39] : memref<40xf32, #tpu.memory_space<smem>>
    %213 = vector.broadcast %209 : f32 to vector<16x8xf32>
    %214 = arith.mulf %208, %213 : vector<16x8xf32>
    %cst_43 = arith.constant dense<0.000000e+00> : vector<16x128xf32>
    %215 = tpu.matmul %214, %6, %cst_43 {dimension_numbers = #tpu.dot_dimension_numbers<[1], [0], [0], [1], [0, 0, 1, 1], [], []>} : vector<16x8xf32>, vector<8x128xf32>, vector<16x128xf32> -> vector<16x128xf32>
    %216 = arith.addf %215, %5 : vector<16x128xf32>
    %217 = vector.broadcast %210 : f32 to vector<1x128xf32>
    %218 = arith.mulf %217, %7 : vector<1x128xf32>
    %219 = vector.broadcast %218 : vector<1x128xf32> to vector<16x128xf32>
    %220 = arith.addf %216, %219 : vector<16x128xf32>
    %cst_44 = arith.constant 0.000000e+00 : f32
    %221 = vector.broadcast %cst_44 : f32 to vector<16x128xf32>
    %222 = arith.maximumf %220, %221 : vector<16x128xf32>
    %cst_45 = arith.constant dense<0.000000e+00> : vector<16x8xf32>
    %223 = tpu.matmul %222, %8, %cst_45 {dimension_numbers = #tpu.dot_dimension_numbers<[1], [0], [0], [1], [0, 0, 1, 1], [], []>} : vector<16x128xf32>, vector<128x8xf32>, vector<16x8xf32> -> vector<16x8xf32>
    %224 = vector.broadcast %9 : vector<1x8xf32> to vector<16x8xf32>
    %225 = arith.addf %223, %224 : vector<16x8xf32>
    %226 = vector.broadcast %211 : f32 to vector<16x8xf32>
    %227 = arith.mulf %226, %208 : vector<16x8xf32>
    %228 = vector.broadcast %212 : f32 to vector<16x8xf32>
    %229 = arith.mulf %228, %225 : vector<16x8xf32>
    %230 = arith.subf %227, %229 : vector<16x8xf32>
    %c0_46 = arith.constant 0 : index
    %c0_47 = arith.constant 0 : index
    %231 = vector.load %arg9[%c0_46, %c0_47] : memref<16x8xf32, #tpu.memory_space<vmem>>, vector<16x8xf32>
    tpu.vector_store %arg9[%c0_46, %c0_47], %230 {strides = array<i32>} : memref<16x8xf32, #tpu.memory_space<vmem>>, vector<16x8xf32>,
    return
  }
}

</mosaic_0001>

<llo_original>
// kernel: diffusion_decoder_forward.1
$region0: #{diffusion_decoder_forward.1}
  #allocation0 [shape = 'u32[]', space=smem, size = 0x4, offset = 0x4, fixed_abs, tag = 'smem constant byte address 0x4 - core index']
  #allocation1 [shape = 'u32[144,128]{1,0:T(1,128)}', space=vmem, size = 0x12000, scoped, tag = 'internal scratch']
  %s0 = inlined_call_operand.vmem [shape: f32[40], index: 0, kind: input, shape index: {}]
  %s1 = inlined_call_operand.vmem [shape: f32[16,8], index: 1, kind: input, shape index: {}]
  %s2 = inlined_call_operand.vmem [shape: f32[16,64], index: 2, kind: input, shape index: {}]
  %s3 = inlined_call_operand.hbm [shape: f32[64,128], index: 3, kind: input, shape index: {}]
  %s4 = inlined_call_operand.vmem [shape: f32[8,128], index: 4, kind: input, shape index: {}]
  %s5 = inlined_call_operand.vmem [shape: f32[1,128], index: 5, kind: input, shape index: {}]
  %s6 = inlined_call_operand.vmem [shape: f32[1,128], index: 6, kind: input, shape index: {}]
  %s7 = inlined_call_operand.vmem [shape: f32[128,8], index: 7, kind: input, shape index: {}]
  %s8 = inlined_call_operand.vmem [shape: f32[1,8], index: 8, kind: input, shape index: {}]
  %s9 = inlined_call_operand.hbm [shape: f32[16,8], index: 9, kind: output, shape index: {}]
  %s10 = sld [smem:[#allocation0]]
  $region54: #{diffusion_decoder_forward.1} parent=0
    _
  %s12 = ssub.s32 1, %s10
  %s13 = scalar_select 0, %s12, %s10
  $region1: #{diffusion_decoder_forward.1} parent=0
    #allocation2 [shape = 'u8[512]{0}', space=smem, size = 0x200, scoped, tag = 'input window, operand 0, single buffered']
    #allocation3 [shape = 's32[1]{0}', space=sflag, size = 0x4, scoped, tag = 'scoped memory for diffusion_decoder_forward.1']
    #allocation4 [shape = 's32[1]{0}', space=sflag, size = 0x4, scoped, tag = 'scoped memory for diffusion_decoder_forward.1']
    #allocation5 [shape = 's32[1]{0}', space=sflag, size = 0x4, scoped, tag = 'scoped memory for diffusion_decoder_forward.1']
    #allocation6 [shape = 'u8[32768]{0}', space=vmem, size = 0x8000, scoped, tag = 'input window, operand 3, single buffered']
    #allocation7 [shape = 'u8[8192]{0}', space=vmem, size = 0x2000, scoped, tag = 'output window, operand 0, single buffered']
    %14 = vsyncpa [#allocation5], 0
    %15 = vsyncpa [#allocation3], 0
    %16 = vsyncpa [#allocation4], 0
    // Predicated region
    $region2: #{diffusion_decoder_forward.1} parent=1 // pred_check
      _
    $region3: #{diffusion_decoder_forward.1} parent=1 // pred_check_branch
      %18 = sbr.rel (0) target = $region5
    $region4: #{diffusion_decoder_forward.1} parent=1 // pred_region
      %s20 = ssub.s32 16, 16
      %21 = vsyncadd [#allocation5], %s20
      %s23 = sshll.u32 %s0, 4
      %s24 = int_to_ptr.vmem [resolvable:$true] %s23
      %26 = dma.vmem_to_smem %s24, 16, [#allocation2], [#allocation5]
    $region5: #{diffusion_decoder_forward.1} parent=1 // pred_fallthru
      _
    // Predicated region
    $region6: #{diffusion_decoder_forward.1} parent=1 // pred_check
      _
    $region7: #{diffusion_decoder_forward.1} parent=1 // pred_check_branch
      %28 = sbr.rel (0) target = $region9
    $region8: #{diffusion_decoder_forward.1} parent=1 // pred_region
      _
    $region9: #{diffusion_decoder_forward.1} parent=1 // pred_fallthru
      _
    // Predicated region
    $region10: #{diffusion_decoder_forward.1} parent=1 // pred_check
      _
    $region11: #{diffusion_decoder_forward.1} parent=1 // pred_check_branch
      %30 = sbr.rel (0) target = $region13
    $region12: #{diffusion_decoder_forward.1} parent=1 // pred_region
      _
    $region13: #{diffusion_decoder_forward.1} parent=1 // pred_fallthru
      _
    // Predicated region
    $region14: #{diffusion_decoder_forward.1} parent=1 // pred_check
      _
    $region15: #{diffusion_decoder_forward.1} parent=1 // pred_check_branch
      %32 = sbr.rel (0) target = $region17
    $region16: #{diffusion_decoder_forward.1} parent=1 // pred_region
      %s34 = ssub.s32 1024, 1024
      %35 = vsyncadd [#allocation3], %s34
      %s36 = sshll.u32 [#allocation6], 4
      %s37 = int_to_ptr.vmem [resolvable:$true] %s36
      %42 = dma.hbm_to_vmem [thread:$0]  %s3, 1024, %s37, [#allocation3], 128, 128, 8
    $region17: #{diffusion_decoder_forward.1} parent=1 // pred_fallthru
      _
    // Predicated region
    $region18: #{diffusion_decoder_forward.1} parent=1 // pred_check
      _
    $region19: #{diffusion_decoder_forward.1} parent=1 // pred_check_branch
      %44 = sbr.rel (0) target = $region21
    $region20: #{diffusion_decoder_forward.1} parent=1 // pred_region
      _
    $region21: #{diffusion_decoder_forward.1} parent=1 // pred_fallthru
      _
    // Predicated region
    $region22: #{diffusion_decoder_forward.1} parent=1 // pred_check
      _
    $region23: #{diffusion_decoder_forward.1} parent=1 // pred_check_branch
      %46 = sbr.rel (0) target = $region25
    $region24: #{diffusion_decoder_forward.1} parent=1 // pred_region
      _
    $region25: #{diffusion_decoder_forward.1} parent=1 // pred_fallthru
      _
    // Predicated region
    $region26: #{diffusion_decoder_forward.1} parent=1 // pred_check
      _
    $region27: #{diffusion_decoder_forward.1} parent=1 // pred_check_branch
      %48 = sbr.rel (0) target = $region29
    $region28: #{diffusion_decoder_forward.1} parent=1 // pred_region
      _
    $region29: #{diffusion_decoder_forward.1} parent=1 // pred_fallthru
      _
    // Predicated region
    $region30: #{diffusion_decoder_forward.1} parent=1 // pred_check
      _
    $region31: #{diffusion_decoder_forward.1} parent=1 // pred_check_branch
      %50 = sbr.rel (0) target = $region33
    $region32: #{diffusion_decoder_forward.1} parent=1 // pred_region
      _
    $region33: #{diffusion_decoder_forward.1} parent=1 // pred_fallthru
      _
    // Predicated region
    $region34: #{diffusion_decoder_forward.1} parent=1 // pred_check
      _
    $region35: #{diffusion_decoder_forward.1} parent=1 // pred_check_branch
      %52 = sbr.rel (0) target = $region37
    $region36: #{diffusion_decoder_forward.1} parent=1 // pred_region
      _
    $region37: #{diffusion_decoder_forward.1} parent=1 // pred_fallthru
      _
    // Predicated region
    $region38: #{diffusion_decoder_forward.1} parent=1 // pred_check
      _
    $region39: #{diffusion_decoder_forward.1} parent=1 // pred_check_branch
      %54 = sbr.rel (0) target = $region41
    $region40: #{diffusion_decoder_forward.1} parent=1 // pred_region
      %55 = dma.done [#allocation5], 16
    $region41: #{diffusion_decoder_forward.1} parent=1 // pred_fallthru
      _
    // Predicated region
    $region42: #{diffusion_decoder_forward.1} parent=1 // pred_check
      _
    $region43: #{diffusion_decoder_forward.1} parent=1 // pred_check_branch
      %57 = sbr.rel (0) target = $region45
    $region44: #{diffusion_decoder_forward.1} parent=1 // pred_region
      %58 = dma.done [#allocation3], 1024
    $region45: #{diffusion_decoder_forward.1} parent=1 // pred_fallthru
      _
    %59 = sfence
    %v60 = vld [vmem:[%s2] sm:$0xff]
    %v61 = vld [vmem:[%s2 + $0x8] sm:$0xff]
    %v62 = vld [vmem:[#allocation6] sm:$0xff]
    %v63 = vld [vmem:[#allocation6 + $0x8] sm:$0xff]
    %v64 = vld [vmem:[#allocation6 + $0x10] sm:$0xff]
    %v65 = vld [vmem:[#allocation6 + $0x18] sm:$0xff]
    %v66 = vld [vmem:[#allocation6 + $0x20] sm:$0xff]
    %v67 = vld [vmem:[#allocation6 + $0x28] sm:$0xff]
    %v68 = vld [vmem:[#allocation6 + $0x30] sm:$0xff]
    %v69 = vld [vmem:[#allocation6 + $0x38] sm:$0xff]
    %v70 = vld [vmem:[%s6] sm:$0x1]
    %v72 = vlaneseq
    %v73 = vshrl.u32 %v72, 7
    %v74 = vsub.s32 0, %v73
    %v75 = vrot.slane %v70, %v74
    %vm77 = vcmask 523264
    %v79 = vsel %vm77, %v60, 0
    %v82 = vsel %vm77, %v61, 0
    %84 = vmatprep.subr.mxu0 0.0
    %85 = vmatpush1.msra.mxu0 0.0
    %86 = vmatprep.subr.mxu0 0.0
    %87 = vmatpush1.msra.mxu0 0.0
    %88 = vmatprep.subr.mxu0 0.0
    %89 = vmatpush1.msra.mxu0 0.0
    %90 = vmatprep.subr.mxu0 0.0
    %91 = vmatpush1.msra.mxu0 0.0
    %92 = vmatprep.subr.mxu0 0.0
    %93 = vmatpush1.msra.mxu0 0.0
    %94 = vmatprep.subr.mxu0 0.0
    %95 = vmatpush1.msra.mxu0 0.0
    %96 = vmatprep.subr.mxu0 0.0
    %97 = vmatpush1.msra.mxu0 0.0
    %98 = vmatprep.subr.mxu0 0.0
    %99 = vmatpush1.msra.mxu0 0.0
    %100 = vmatprep.subr.mxu0 0.0
    %101 = vmatpush1.msra.mxu0 %v69
    %102 = vmatprep.subr.mxu0 0.0
    %103 = vmatpush1.msra.mxu0 %v68
    %104 = vmatprep.subr.mxu0 0.0
    %105 = vmatpush1.msra.mxu0 %v67
    %106 = vmatprep.subr.mxu0 0.0
    %107 = vmatpush1.msra.mxu0 %v66
    %108 = vmatprep.subr.mxu0 0.0
    %109 = vmatpush1.msra.mxu0 %v65
    %110 = vmatprep.subr.mxu0 0.0
    %111 = vmatpush1.msra.mxu0 %v64
    %112 = vmatprep.subr.mxu0 0.0
    %113 = vmatpush1.msra.mxu0 %v63
    %114 = vmatprep.subr.mxu0 0.0
    %115 = vmatpush1.msra.mxu0 %v62
    %116 = vmatprep.subr.mxu0 0.0
    %117 = vmatpush2.msra.mxu0 0.0
    %118 = vmatprep.subr.mxu0 0.0
    %119 = vmatpush2.msra.mxu0 0.0
    %120 = vmatprep.subr.mxu0 0.0
    %121 = vmatpush2.msra.mxu0 0.0
    %122 = vmatprep.subr.mxu0 0.0
    %123 = vmatpush2.msra.mxu0 0.0
    %124 = vmatprep.subr.mxu0 0.0
    %125 = vmatpush2.msra.mxu0 0.0
    %126 = vmatprep.subr.mxu0 0.0
    %127 = vmatpush2.msra.mxu0 0.0
    %128 = vmatprep.subr.mxu0 0.0
    %129 = vmatpush2.msra.mxu0 0.0
    %130 = vmatprep.subr.mxu0 0.0
    %131 = vmatpush2.msra.mxu0 0.0
    %132 = vmatprep.subr.mxu0 0.0
    %133 = vmatpush2.msra.mxu0 0.0
    %134 = vmatprep.subr.mxu0 0.0
    %135 = vmatpush2.msra.mxu0 0.0
    %136 = vmatprep.subr.mxu0 0.0
    %137 = vmatpush2.msra.mxu0 0.0
    %138 = vmatprep.subr.mxu0 0.0
    %139 = vmatpush2.msra.mxu0 0.0
    %140 = vmatprep.subr.mxu0 0.0
    %141 = vmatpush2.msra.mxu0 0.0
    %142 = vmatprep.subr.mxu0 0.0
    %143 = vmatpush2.msra.mxu0 0.0
    %144 = vmatprep.subr.mxu0 0.0
    %145 = vmatpush2.msra.mxu0 0.0
    %146 = vmatprep.subr.mxu0 0.0
    %147 = vmatpush2.msra.mxu0 0.0
    %148 = vmatprep.mubr.f32.mxu0 0.0
    %149 = vmatmul.mubr.f32.gmra.mxu0 %v79
    %v150 = vpop.f32.mrf.mxu0
    %v151 = vadd.f32 %v75, %v150
    %v152 = vpop.f32.mrf.mxu0
    %153 = vmatprep.mubr.f32.mxu0 0.0
    %154 = vmatmul.mubr.f32.gmra.mxu0 %v82
    %v155 = vpop.f32.mrf.mxu0
    %v156 = vadd.f32 %v75, %v155
    %v157 = vpop.f32.mrf.mxu0
    %158 = vdwg.mxu0
    %v159 = vld [vmem:[%s4] sm:$0xff]
    %v160 = vld [vmem:[%s5] sm:$0x1]
    %v161 = vld [vmem:[%s7] sm:$0xff]
    %v162 = vld [vmem:[%s7 + $0x8] sm:$0xff]
    %v163 = vld [vmem:[%s7 + $0x10] sm:$0xff]
    %v164 = vld [vmem:[%s7 + $0x18] sm:$0xff]
    %v165 = vld [vmem:[%s7 + $0x20] sm:$0xff]
    %v166 = vld [vmem:[%s7 + $0x28] sm:$0xff]
    %v167 = vld [vmem:[%s7 + $0x30] sm:$0xff]
    %v168 = vld [vmem:[%s7 + $0x38] sm:$0xff]
    %v169 = vld [vmem:[%s7 + $0x40] sm:$0xff]
    %v170 = vld [vmem:[%s7 + $0x48] sm:$0xff]
    %v171 = vld [vmem:[%s7 + $0x50] sm:$0xff]
    %v172 = vld [vmem:[%s7 + $0x58] sm:$0xff]
    %v173 = vld [vmem:[%s7 + $0x60] sm:$0xff]
    %v174 = vld [vmem:[%s7 + $0x68] sm:$0xff]
    %v175 = vld [vmem:[%s7 + $0x70] sm:$0xff]
    %v176 = vld [vmem:[%s7 + $0x78] sm:$0xff]
    %v177 = vld [vmem:[%s8] sm:$0x1]
    %v178 = vld [vmem:[%s1] sm:$0xff]
    %v179 = vld [vmem:[%s1 + $0x8] sm:$0xff]
    %s180 = sld [smem:[#allocation2]]
    %s181 = sld [smem:[#allocation2 + $0x1]]
    %s182 = sld [smem:[#allocation2 + $0x2]]
    %s183 = sld [smem:[#allocation2 + $0x3]]
    %v184 = vstv %s180
    %v185 = vmul.f32 %v178, %v184
    %v186 = vmul.f32 %v179, %v184
    %vm187 = vcmask 64512
    %v189 = vsel %vm187, %v185, 0
    %v192 = vsel %vm187, %v186, 0
    %194 = vmatprep.subr.mxu0 0.0
    %195 = vmatpush1.msra.mxu0 0.0
    %196 = vmatprep.subr.mxu0 0.0
    %197 = vmatpush1.msra.mxu0 0.0
    %198 = vmatprep.subr.mxu0 0.0
    %199 = vmatpush1.msra.mxu0 0.0
    %200 = vmatprep.subr.mxu0 0.0
    %201 = vmatpush1.msra.mxu0 0.0
    %202 = vmatprep.subr.mxu0 0.0
    %203 = vmatpush1.msra.mxu0 0.0
    %204 = vmatprep.subr.mxu0 0.0
    %205 = vmatpush1.msra.mxu0 0.0
    %206 = vmatprep.subr.mxu0 0.0
    %207 = vmatpush1.msra.mxu0 0.0
    %208 = vmatprep.subr.mxu0 0.0
    %209 = vmatpush1.msra.mxu0 0.0
    %210 = vmatprep.subr.mxu0 0.0
    %211 = vmatpush1.msra.mxu0 0.0
    %212 = vmatprep.subr.mxu0 0.0
    %213 = vmatpush1.msra.mxu0 0.0
    %214 = vmatprep.subr.mxu0 0.0
    %215 = vmatpush1.msra.mxu0 0.0
    %216 = vmatprep.subr.mxu0 0.0
    %217 = vmatpush1.msra.mxu0 0.0
    %218 = vmatprep.subr.mxu0 0.0
    %219 = vmatpush1.msra.mxu0 0.0
    %220 = vmatprep.subr.mxu0 0.0
    %221 = vmatpush1.msra.mxu0 0.0
    %222 = vmatprep.subr.mxu0 0.0
    %223 = vmatpush1.msra.mxu0 0.0
    %224 = vmatprep.subr.mxu0 0.0
    %225 = vmatpush1.msra.mxu0 %v159
    %226 = vmatprep.subr.mxu0 0.0
    %227 = vmatpush2.msra.mxu0 0.0
    %228 = vmatprep.subr.mxu0 0.0
    %229 = vmatpush2.msra.mxu0 0.0
    %230 = vmatprep.subr.mxu0 0.0
    %231 = vmatpush2.msra.mxu0 0.0
    %232 = vmatprep.subr.mxu0 0.0
    %233 = vmatpush2.msra.mxu0 0.0
    %234 = vmatprep.subr.mxu0 0.0
    %235 = vmatpush2.msra.mxu0 0.0
    %236 = vmatprep.subr.mxu0 0.0
    %237 = vmatpush2.msra.mxu0 0.0
    %238 = vmatprep.subr.mxu0 0.0
    %239 = vmatpush2.msra.mxu0 0.0
    %240 = vmatprep.subr.mxu0 0.0
    %241 = vmatpush2.msra.mxu0 0.0
    %242 = vmatprep.subr.mxu0 0.0
    %243 = vmatpush2.msra.mxu0 0.0
    %244 = vmatprep.subr.mxu0 0.0
    %245 = vmatpush2.msra.mxu0 0.0
    %246 = vmatprep.subr.mxu0 0.0
    %247 = vmatpush2.msra.mxu0 0.0
    %248 = vmatprep.subr.mxu0 0.0
    %249 = vmatpush2.msra.mxu0 0.0
    %250 = vmatprep.subr.mxu0 0.0
    %251 = vmatpush2.msra.mxu0 0.0
    %252 = vmatprep.subr.mxu0 0.0
    %253 = vmatpush2.msra.mxu0 0.0
    %254 = vmatprep.subr.mxu0 0.0
    %255 = vmatpush2.msra.mxu0 0.0
    %256 = vmatprep.subr.mxu0 0.0
    %257 = vmatpush2.msra.mxu0 0.0
    %258 = vmatprep.mubr.f32.mxu0 0.0
    %259 = vmatmul.mubr.f32.gmra.mxu0 %v189
    %v260 = vpop.f32.mrf.mxu0
    %v261 = vadd.f32 %v151, %v260
    %v262 = vpop.f32.mrf.mxu0
    %263 = vmatprep.mubr.f32.mxu0 0.0
    %264 = vmatmul.mubr.f32.gmra.mxu0 %v192
    %v265 = vpop.f32.mrf.mxu0
    %v266 = vadd.f32 %v156, %v265
    %v267 = vpop.f32.mrf.mxu0
    %268 = vdwg.mxu0
    %v269 = vstv %s181
    %v270 = vmul.f32 %v269, %v160
    %v272 = vlaneseq
    %v273 = vshrl.u32 %v272, 7
    %v274 = vsub.s32 0, %v273
    %v275 = vrot.slane %v270, %v274
    %v277 = vadd.f32 %v261, %v275
    %v278 = vadd.f32 %v266, %v275
    %v279 = vmax.f32 %v277, 0.0
    %v280 = vmax.f32 %v278, 0.0
    %v282 = vlaneseq
    %v283 = vshrl.u32 %v282, 7
    %v284 = vsub.s32 0, %v283
    %v285 = vrot.slane %v177, %v284
    %287 = vmatprep.subr.mxu0 0.0
    %288 = vmatpush1.msra.mxu0 %v176
    %289 = vmatprep.subr.mxu0 0.0
    %290 = vmatpush1.msra.mxu0 %v175
    %291 = vmatprep.subr.mxu0 0.0
    %292 = vmatpush1.msra.mxu0 %v174
    %293 = vmatprep.subr.mxu0 0.0
    %294 = vmatpush1.msra.mxu0 %v173
    %295 = vmatprep.subr.mxu0 0.0
    %296 = vmatpush1.msra.mxu0 %v172
    %297 = vmatprep.subr.mxu0 0.0
    %298 = vmatpush1.msra.mxu0 %v171
    %299 = vmatprep.subr.mxu0 0.0
    %300 = vmatpush1.msra.mxu0 %v170
    %301 = vmatprep.subr.mxu0 0.0
    %302 = vmatpush1.msra.mxu0 %v169
    %303 = vmatprep.subr.mxu0 0.0
    %304 = vmatpush1.msra.mxu0 %v168
    %305 = vmatprep.subr.mxu0 0.0
    %306 = vmatpush1.msra.mxu0 %v167
    %307 = vmatprep.subr.mxu0 0.0
    %308 = vmatpush1.msra.mxu0 %v166
    %309 = vmatprep.subr.mxu0 0.0
    %310 = vmatpush1.msra.mxu0 %v165
    %311 = vmatprep.subr.mxu0 0.0
    %312 = vmatpush1.msra.mxu0 %v164
    %313 = vmatprep.subr.mxu0 0.0
    %314 = vmatpush1.msra.mxu0 %v163
    %315 = vmatprep.subr.mxu0 0.0
    %316 = vmatpush1.msra.mxu0 %v162
    %317 = vmatprep.subr.mxu0 0.0
    %318 = vmatpush1.msra.mxu0 %v161
    %319 = vmatprep.subr.mxu0 0.0
    %320 = vmatpush2.msra.mxu0 0.0
    %321 = vmatprep.subr.mxu0 0.0
    %322 = vmatpush2.msra.mxu0 0.0
    %323 = vmatprep.subr.mxu0 0.0
    %324 = vmatpush2.msra.mxu0 0.0
    %325 = vmatprep.subr.mxu0 0.0
    %326 = vmatpush2.msra.mxu0 0.0
    %327 = vmatprep.subr.mxu0 0.0
    %328 = vmatpush2.msra.mxu0 0.0
    %329 = vmatprep.subr.mxu0 0.0
    %330 = vmatpush2.msra.mxu0 0.0
    %331 = vmatprep.subr.mxu0 0.0
    %332 = vmatpush2.msra.mxu0 0.0
    %333 = vmatprep.subr.mxu0 0.0
    %334 = vmatpush2.msra.mxu0 0.0
    %335 = vmatprep.subr.mxu0 0.0
    %336 = vmatpush2.msra.mxu0 0.0
    %337 = vmatprep.subr.mxu0 0.0
    %338 = vmatpush2.msra.mxu0 0.0
    %339 = vmatprep.subr.mxu0 0.0
    %340 = vmatpush2.msra.mxu0 0.0
    %341 = vmatprep.subr.mxu0 0.0
    %342 = vmatpush2.msra.mxu0 0.0
    %343 = vmatprep.subr.mxu0 0.0
    %344 = vmatpush2.msra.mxu0 0.0
    %345 = vmatprep.subr.mxu0 0.0
    %346 = vmatpush2.msra.mxu0 0.0
    %347 = vmatprep.subr.mxu0 0.0
    %348 = vmatpush2.msra.mxu0 0.0
    %349 = vmatprep.subr.mxu0 0.0
    %350 = vmatpush2.msra.mxu0 0.0
    %351 = vmatprep.mubr.f32.mxu0 0.0
    %352 = vmatmul.mubr.f32.gmra.mxu0 %v279
    %v353 = vpop.f32.mrf.mxu0
    %v354 = vadd.f32 %v285, %v353
    %v355 = vpop.f32.mrf.mxu0
    %356 = vmatprep.mubr.f32.mxu0 0.0
    %357 = vmatmul.mubr.f32.gmra.mxu0 %v280
    %v358 = vpop.f32.mrf.mxu0
    %v359 = vadd.f32 %v285, %v358
    %v360 = vpop.f32.mrf.mxu0
    %361 = vdwg.mxu0
    %v362 = vstv %s182
    %v363 = vmul.f32 %v362, %v178
    %v364 = vmul.f32 %v362, %v179
    %v365 = vstv %s183
    %v366 = vmul.f32 %v365, %v354
    %v367 = vmul.f32 %v365, %v359
    %v368 = vsub.f32 %v363, %v366
    %v369 = vsub.f32 %v364, %v367
    %s370 = sld [smem:[#allocation2 + $0x4]]
    %s371 = sld [smem:[#allocation2 + $0x5]]
    %s372 = sld [smem:[#allocation2 + $0x6]]
    %s373 = sld [smem:[#allocation2 + $0x7]]
    %v374 = vstv %s370
    %v375 = vmul.f32 %v368, %v374
    %v376 = vmul.f32 %v369, %v374
    %v378 = vsel %vm187, %v375, 0
    %v381 = vsel %vm187, %v376, 0
    %383 = vmatprep.subr.mxu0 0.0
    %384 = vmatpush1.msra.mxu0 0.0
    %385 = vmatprep.subr.mxu0 0.0
    %386 = vmatpush1.msra.mxu0 0.0
    %387 = vmatprep.subr.mxu0 0.0
    %388 = vmatpush1.msra.mxu0 0.0
    %389 = vmatprep.subr.mxu0 0.0
    %390 = vmatpush1.msra.mxu0 0.0
    %391 = vmatprep.subr.mxu0 0.0
    %392 = vmatpush1.msra.mxu0 0.0
    %393 = vmatprep.subr.mxu0 0.0
    %394 = vmatpush1.msra.mxu0 0.0
    %395 = vmatprep.subr.mxu0 0.0
    %396 = vmatpush1.msra.mxu0 0.0
    %397 = vmatprep.subr.mxu0 0.0
    %398 = vmatpush1.msra.mxu0 0.0
    %399 = vmatprep.subr.mxu0 0.0
    %400 = vmatpush1.msra.mxu0 0.0
    %401 = vmatprep.subr.mxu0 0.0
    %402 = vmatpush1.msra.mxu0 0.0
    %403 = vmatprep.subr.mxu0 0.0
    %404 = vmatpush1.msra.mxu0 0.0
    %405 = vmatprep.subr.mxu0 0.0
    %406 = vmatpush1.msra.mxu0 0.0
    %407 = vmatprep.subr.mxu0 0.0
    %408 = vmatpush1.msra.mxu0 0.0
    %409 = vmatprep.subr.mxu0 0.0
    %410 = vmatpush1.msra.mxu0 0.0
    %411 = vmatprep.subr.mxu0 0.0
    %412 = vmatpush1.msra.mxu0 0.0
    %413 = vmatprep.subr.mxu0 0.0
    %414 = vmatpush1.msra.mxu0 %v159
    %415 = vmatprep.subr.mxu0 0.0
    %416 = vmatpush2.msra.mxu0 0.0
    %417 = vmatprep.subr.mxu0 0.0
    %418 = vmatpush2.msra.mxu0 0.0
    %419 = vmatprep.subr.mxu0 0.0
    %420 = vmatpush2.msra.mxu0 0.0
    %421 = vmatprep.subr.mxu0 0.0
    %422 = vmatpush2.msra.mxu0 0.0
    %423 = vmatprep.subr.mxu0 0.0
    %424 = vmatpush2.msra.mxu0 0.0
    %425 = vmatprep.subr.mxu0 0.0
    %426 = vmatpush2.msra.mxu0 0.0
    %427 = vmatprep.subr.mxu0 0.0
    %428 = vmatpush2.msra.mxu0 0.0
    %429 = vmatprep.subr.mxu0 0.0
    %430 = vmatpush2.msra.mxu0 0.0
    %431 = vmatprep.subr.mxu0 0.0
    %432 = vmatpush2.msra.mxu0 0.0
    %433 = vmatprep.subr.mxu0 0.0
    %434 = vmatpush2.msra.mxu0 0.0
    %435 = vmatprep.subr.mxu0 0.0
    %436 = vmatpush2.msra.mxu0 0.0
    %437 = vmatprep.subr.mxu0 0.0
    %438 = vmatpush2.msra.mxu0 0.0
    %439 = vmatprep.subr.mxu0 0.0
    %440 = vmatpush2.msra.mxu0 0.0
    %441 = vmatprep.subr.mxu0 0.0
    %442 = vmatpush2.msra.mxu0 0.0
    %443 = vmatprep.subr.mxu0 0.0
    %444 = vmatpush2.msra.mxu0 0.0
    %445 = vmatprep.subr.mxu0 0.0
    %446 = vmatpush2.msra.mxu0 0.0
    %447 = vmatprep.mubr.f32.mxu0 0.0
    %448 = vmatmul.mubr.f32.gmra.mxu0 %v378
    %v449 = vpop.f32.mrf.mxu0
    %v450 = vadd.f32 %v151, %v449
    %v451 = vpop.f32.mrf.mxu0
    %452 = vmatprep.mubr.f32.mxu0 0.0
    %453 = vmatmul.mubr.f32.gmra.mxu0 %v381
    %v454 = vpop.f32.mrf.mxu0
    %v455 = vadd.f32 %v156, %v454
    %v456 = vpop.f32.mrf.mxu0
    %457 = vdwg.mxu0
    %v458 = vstv %s371
    %v459 = vmul.f32 %v458, %v160
    %v461 = vlaneseq
    %v462 = vshrl.u32 %v461, 7
    %v463 = vsub.s32 0, %v462
    %v464 = vrot.slane %v459, %v463
    %v466 = vadd.f32 %v450, %v464
    %v467 = vadd.f32 %v455, %v464
    %v468 = vmax.f32 %v466, 0.0
    %v469 = vmax.f32 %v467, 0.0
    %470 = vmatprep.subr.mxu0 0.0
    %471 = vmatpush1.msra.mxu0 %v176
    %472 = vmatprep.subr.mxu0 0.0
    %473 = vmatpush1.msra.mxu0 %v175
    %474 = vmatprep.subr.mxu0 0.0
    %475 = vmatpush1.msra.mxu0 %v174
    %476 = vmatprep.subr.mxu0 0.0
    %477 = vmatpush1.msra.mxu0 %v173
    %478 = vmatprep.subr.mxu0 0.0
    %479 = vmatpush1.msra.mxu0 %v172
    %480 = vmatprep.subr.mxu0 0.0
    %481 = vmatpush1.msra.mxu0 %v171
    %482 = vmatprep.subr.mxu0 0.0
    %483 = vmatpush1.msra.mxu0 %v170
    %484 = vmatprep.subr.mxu0 0.0
    %485 = vmatpush1.msra.mxu0 %v169
    %486 = vmatprep.subr.mxu0 0.0
    %487 = vmatpush1.msra.mxu0 %v168
    %488 = vmatprep.subr.mxu0 0.0
    %489 = vmatpush1.msra.mxu0 %v167
    %490 = vmatprep.subr.mxu0 0.0
    %491 = vmatpush1.msra.mxu0 %v166
    %492 = vmatprep.subr.mxu0 0.0
    %493 = vmatpush1.msra.mxu0 %v165
    %494 = vmatprep.subr.mxu0 0.0
    %495 = vmatpush1.msra.mxu0 %v164
    %496 = vmatprep.subr.mxu0 0.0
    %497 = vmatpush1.msra.mxu0 %v163
    %498 = vmatprep.subr.mxu0 0.0
    %499 = vmatpush1.msra.mxu0 %v162
    %500 = vmatprep.subr.mxu0 0.0
    %501 = vmatpush1.msra.mxu0 %v161
    %502 = vmatprep.subr.mxu0 0.0
    %503 = vmatpush2.msra.mxu0 0.0
    %504 = vmatprep.subr.mxu0 0.0
    %505 = vmatpush2.msra.mxu0 0.0
    %506 = vmatprep.subr.mxu0 0.0
    %507 = vmatpush2.msra.mxu0 0.0
    %508 = vmatprep.subr.mxu0 0.0
    %509 = vmatpush2.msra.mxu0 0.0
    %510 = vmatprep.subr.mxu0 0.0
    %511 = vmatpush2.msra.mxu0 0.0
    %512 = vmatprep.subr.mxu0 0.0
    %513 = vmatpush2.msra.mxu0 0.0
    %514 = vmatprep.subr.mxu0 0.0
    %515 = vmatpush2.msra.mxu0 0.0
    %516 = vmatprep.subr.mxu0 0.0
    %517 = vmatpush2.msra.mxu0 0.0
    %518 = vmatprep.subr.mxu0 0.0
    %519 = vmatpush2.msra.mxu0 0.0
    %520 = vmatprep.subr.mxu0 0.0
    %521 = vmatpush2.msra.mxu0 0.0
    %522 = vmatprep.subr.mxu0 0.0
    %523 = vmatpush2.msra.mxu0 0.0
    %524 = vmatprep.subr.mxu0 0.0
    %525 = vmatpush2.msra.mxu0 0.0
    %526 = vmatprep.subr.mxu0 0.0
    %527 = vmatpush2.msra.mxu0 0.0
    %528 = vmatprep.subr.mxu0 0.0
    %529 = vmatpush2.msra.mxu0 0.0
    %530 = vmatprep.subr.mxu0 0.0
    %531 = vmatpush2.msra.mxu0 0.0
    %532 = vmatprep.subr.mxu0 0.0
    %533 = vmatpush2.msra.mxu0 0.0
    %534 = vmatprep.mubr.f32.mxu0 0.0
    %535 = vmatmul.mubr.f32.gmra.mxu0 %v468
    %v536 = vpop.f32.mrf.mxu0
    %v537 = vadd.f32 %v285, %v536
    %v538 = vpop.f32.mrf.mxu0
    %539 = vmatprep.mubr.f32.mxu0 0.0
    %540 = vmatmul.mubr.f32.gmra.mxu0 %v469
    %v541 = vpop.f32.mrf.mxu0
    %v542 = vadd.f32 %v285, %v541
    %v543 = vpop.f32.mrf.mxu0
    %544 = vdwg.mxu0
    %v545 = vstv %s372
    %v546 = vmul.f32 %v545, %v368
    %v547 = vmul.f32 %v545, %v369
    %v548 = vstv %s373
    %v549 = vmul.f32 %v548, %v537
    %v550 = vmul.f32 %v548, %v542
    %v551 = vsub.f32 %v546, %v549
    %v552 = vsub.f32 %v547, %v550
    %s553 = sld [smem:[#allocation2 + $0x8]]
    %s554 = sld [smem:[#allocation2 + $0x9]]
    %s555 = sld [smem:[#allocation2 + $0xa]]
    %s556 = sld [smem:[#allocation2 + $0xb]]
    %v557 = vstv %s553
    %v558 = vmul.f32 %v551, %v557
    %v559 = vmul.f32 %v552, %v557
    %v561 = vsel %vm187, %v558, 0
    %v564 = vsel %vm187, %v559, 0
    %566 = vmatprep.subr.mxu0 0.0
    %567 = vmatpush1.msra.mxu0 0.0
    %568 = vmatprep.subr.mxu0 0.0
    %569 = vmatpush1.msra.mxu0 0.0
    %570 = vmatprep.subr.mxu0 0.0
    %571 = vmatpush1.msra.mxu0 0.0
    %572 = vmatprep.subr.mxu0 0.0
    %573 = vmatpush1.msra.mxu0 0.0
    %574 = vmatprep.subr.mxu0 0.0
    %575 = vmatpush1.msra.mxu0 0.0
    %576 = vmatprep.subr.mxu0 0.0
    %577 = vmatpush1.msra.mxu0 0.0
    %578 = vmatprep.subr.mxu0 0.0
    %579 = vmatpush1.msra.mxu0 0.0
    %580 = vmatprep.subr.mxu0 0.0
    %581 = vmatpush1.msra.mxu0 0.0
    %582 = vmatprep.subr.mxu0 0.0
    %583 = vmatpush1.msra.mxu0 0.0
    %584 = vmatprep.subr.mxu0 0.0
    %585 = vmatpush1.msra.mxu0 0.0
    %586 = vmatprep.subr.mxu0 0.0
    %587 = vmatpush1.msra.mxu0 0.0
    %588 = vmatprep.subr.mxu0 0.0
    %589 = vmatpush1.msra.mxu0 0.0
    %590 = vmatprep.subr.mxu0 0.0
    %591 = vmatpush1.msra.mxu0 0.0
    %592 = vmatprep.subr.mxu0 0.0
    %593 = vmatpush1.msra.mxu0 0.0
    %594 = vmatprep.subr.mxu0 0.0
    %595 = vmatpush1.msra.mxu0 0.0
    %596 = vmatprep.subr.mxu0 0.0
    %597 = vmatpush1.msra.mxu0 %v159
    %598 = vmatprep.subr.mxu0 0.0
    %599 = vmatpush2.msra.mxu0 0.0
    %600 = vmatprep.subr.mxu0 0.0
    %601 = vmatpush2.msra.mxu0 0.0
    %602 = vmatprep.subr.mxu0 0.0
    %603 = vmatpush2.msra.mxu0 0.0
    %604 = vmatprep.subr.mxu0 0.0
    %605 = vmatpush2.msra.mxu0 0.0
    %606 = vmatprep.subr.mxu0 0.0
    %607 = vmatpush2.msra.mxu0 0.0
    %608 = vmatprep.subr.mxu0 0.0
    %609 = vmatpush2.msra.mxu0 0.0
    %610 = vmatprep.subr.mxu0 0.0
    %611 = vmatpush2.msra.mxu0 0.0
    %612 = vmatprep.subr.mxu0 0.0
    %613 = vmatpush2.msra.mxu0 0.0
    %614 = vmatprep.subr.mxu0 0.0
    %615 = vmatpush2.msra.mxu0 0.0
    %616 = vmatprep.subr.mxu0 0.0
    %617 = vmatpush2.msra.mxu0 0.0
    %618 = vmatprep.subr.mxu0 0.0
    %619 = vmatpush2.msra.mxu0 0.0
    %620 = vmatprep.subr.mxu0 0.0
    %621 = vmatpush2.msra.mxu0 0.0
    %622 = vmatprep.subr.mxu0 0.0
    %623 = vmatpush2.msra.mxu0 0.0
    %624 = vmatprep.subr.mxu0 0.0
    %625 = vmatpush2.msra.mxu0 0.0
    %626 = vmatprep.subr.mxu0 0.0
    %627 = vmatpush2.msra.mxu0 0.0
    %628 = vmatprep.subr.mxu0 0.0
    %629 = vmatpush2.msra.mxu0 0.0
    %630 = vmatprep.mubr.f32.mxu0 0.0
    %631 = vmatmul.mubr.f32.gmra.mxu0 %v561
    %v632 = vpop.f32.mrf.mxu0
    %v633 = vadd.f32 %v151, %v632
    %v634 = vpop.f32.mrf.mxu0
    %635 = vmatprep.mubr.f32.mxu0 0.0
    %636 = vmatmul.mubr.f32.gmra.mxu0 %v564
    %v637 = vpop.f32.mrf.mxu0
    %v638 = vadd.f32 %v156, %v637
    %v639 = vpop.f32.mrf.mxu0
    %640 = vdwg.mxu0
    %v641 = vstv %s554
    %v642 = vmul.f32 %v641, %v160
    %v644 = vlaneseq
    %v645 = vshrl.u32 %v644, 7
    %v646 = vsub.s32 0, %v645
    %v647 = vrot.slane %v642, %v646
    %v649 = vadd.f32 %v633, %v647
    %v650 = vadd.f32 %v638, %v647
    %v651 = vmax.f32 %v649, 0.0
    %v652 = vmax.f32 %v650, 0.0
    %653 = vmatprep.subr.mxu0 0.0
    %654 = vmatpush1.msra.mxu0 %v176
    %655 = vmatprep.subr.mxu0 0.0
    %656 = vmatpush1.msra.mxu0 %v175
    %657 = vmatprep.subr.mxu0 0.0
    %658 = vmatpush1.msra.mxu0 %v174
    %659 = vmatprep.subr.mxu0 0.0
    %660 = vmatpush1.msra.mxu0 %v173
    %661 = vmatprep.subr.mxu0 0.0
    %662 = vmatpush1.msra.mxu0 %v172
    %663 = vmatprep.subr.mxu0 0.0
    %664 = vmatpush1.msra.mxu0 %v171
    %665 = vmatprep.subr.mxu0 0.0
    %666 = vmatpush1.msra.mxu0 %v170
    %667 = vmatprep.subr.mxu0 0.0
    %668 = vmatpush1.msra.mxu0 %v169
    %669 = vmatprep.subr.mxu0 0.0
    %670 = vmatpush1.msra.mxu0 %v168
    %671 = vmatprep.subr.mxu0 0.0
    %672 = vmatpush1.msra.mxu0 %v167
    %673 = vmatprep.subr.mxu0 0.0
    %674 = vmatpush1.msra.mxu0 %v166
    %675 = vmatprep.subr.mxu0 0.0
    %676 = vmatpush1.msra.mxu0 %v165
    %677 = vmatprep.subr.mxu0 0.0
    %678 = vmatpush1.msra.mxu0 %v164
    %679 = vmatprep.subr.mxu0 0.0
    %680 = vmatpush1.msra.mxu0 %v163
    %681 = vmatprep.subr.mxu0 0.0
    %682 = vmatpush1.msra.mxu0 %v162
    %683 = vmatprep.subr.mxu0 0.0
    %684 = vmatpush1.msra.mxu0 %v161
    %685 = vmatprep.subr.mxu0 0.0
    %686 = vmatpush2.msra.mxu0 0.0
    %687 = vmatprep.subr.mxu0 0.0
    %688 = vmatpush2.msra.mxu0 0.0
    %689 = vmatprep.subr.mxu0 0.0
    %690 = vmatpush2.msra.mxu0 0.0
    %691 = vmatprep.subr.mxu0 0.0
    %692 = vmatpush2.msra.mxu0 0.0
    %693 = vmatprep.subr.mxu0 0.0
    %694 = vmatpush2.msra.mxu0 0.0
    %695 = vmatprep.subr.mxu0 0.0
    %696 = vmatpush2.msra.mxu0 0.0
    %697 = vmatprep.subr.mxu0 0.0
    %698 = vmatpush2.msra.mxu0 0.0
    %699 = vmatprep.subr.mxu0 0.0
    %700 = vmatpush2.msra.mxu0 0.0
    %701 = vmatprep.subr.mxu0 0.0
    %702 = vmatpush2.msra.mxu0 0.0
    %703 = vmatprep.subr.mxu0 0.0
    %704 = vmatpush2.msra.mxu0 0.0
    %705 = vmatprep.subr.mxu0 0.0
    %706 = vmatpush2.msra.mxu0 0.0
    %707 = vmatprep.subr.mxu0 0.0
    %708 = vmatpush2.msra.mxu0 0.0
    %709 = vmatprep.subr.mxu0 0.0
    %710 = vmatpush2.msra.mxu0 0.0
    %711 = vmatprep.subr.mxu0 0.0
    %712 = vmatpush2.msra.mxu0 0.0
    %713 = vmatprep.subr.mxu0 0.0
    %714 = vmatpush2.msra.mxu0 0.0
    %715 = vmatprep.subr.mxu0 0.0
    %716 = vmatpush2.msra.mxu0 0.0
    %717 = vmatprep.mubr.f32.mxu0 0.0
    %718 = vmatmul.mubr.f32.gmra.mxu0 %v651
    %v719 = vpop.f32.mrf.mxu0
    %v720 = vadd.f32 %v285, %v719
    %v721 = vpop.f32.mrf.mxu0
    %722 = vmatprep.mubr.f32.mxu0 0.0
    %723 = vmatmul.mubr.f32.gmra.mxu0 %v652
    %v724 = vpop.f32.mrf.mxu0
    %v725 = vadd.f32 %v285, %v724
    %v726 = vpop.f32.mrf.mxu0
    %727 = vdwg.mxu0
    %v728 = vstv %s555
    %v729 = vmul.f32 %v728, %v551
    %v730 = vmul.f32 %v728, %v552
    %v731 = vstv %s556
    %v732 = vmul.f32 %v731, %v720
    %v733 = vmul.f32 %v731, %v725
    %v734 = vsub.f32 %v729, %v732
    %v735 = vsub.f32 %v730, %v733
    %s736 = sld [smem:[#allocation2 + $0xc]]
    %s737 = sld [smem:[#allocation2 + $0xd]]
    %s738 = sld [smem:[#allocation2 + $0xe]]
    %s739 = sld [smem:[#allocation2 + $0xf]]
    %v740 = vstv %s736
    %v741 = vmul.f32 %v734, %v740
    %v742 = vmul.f32 %v735, %v740
    %v744 = vsel %vm187, %v741, 0
    %v747 = vsel %vm187, %v742, 0
    %749 = vmatprep.subr.mxu0 0.0
    %750 = vmatpush1.msra.mxu0 0.0
    %751 = vmatprep.subr.mxu0 0.0
    %752 = vmatpush1.msra.mxu0 0.0
    %753 = vmatprep.subr.mxu0 0.0
    %754 = vmatpush1.msra.mxu0 0.0
    %755 = vmatprep.subr.mxu0 0.0
    %756 = vmatpush1.msra.mxu0 0.0
    %757 = vmatprep.subr.mxu0 0.0
    %758 = vmatpush1.msra.mxu0 0.0
    %759 = vmatprep.subr.mxu0 0.0
    %760 = vmatpush1.msra.mxu0 0.0
    %761 = vmatprep.subr.mxu0 0.0
    %762 = vmatpush1.msra.mxu0 0.0
    %763 = vmatprep.subr.mxu0 0.0
    %764 = vmatpush1.msra.mxu0 0.0
    %765 = vmatprep.subr.mxu0 0.0
    %766 = vmatpush1.msra.mxu0 0.0
    %767 = vmatprep.subr.mxu0 0.0
    %768 = vmatpush1.msra.mxu0 0.0
    %769 = vmatprep.subr.mxu0 0.0
    %770 = vmatpush1.msra.mxu0 0.0
    %771 = vmatprep.subr.mxu0 0.0
    %772 = vmatpush1.msra.mxu0 0.0
    %773 = vmatprep.subr.mxu0 0.0
    %774 = vmatpush1.msra.mxu0 0.0
    %775 = vmatprep.subr.mxu0 0.0
    %776 = vmatpush1.msra.mxu0 0.0
    %777 = vmatprep.subr.mxu0 0.0
    %778 = vmatpush1.msra.mxu0 0.0
    %779 = vmatprep.subr.mxu0 0.0
    %780 = vmatpush1.msra.mxu0 %v159
    %781 = vmatprep.subr.mxu0 0.0
    %782 = vmatpush2.msra.mxu0 0.0
    %783 = vmatprep.subr.mxu0 0.0
    %784 = vmatpush2.msra.mxu0 0.0
    %785 = vmatprep.subr.mxu0 0.0
    %786 = vmatpush2.msra.mxu0 0.0
    %787 = vmatprep.subr.mxu0 0.0
    %788 = vmatpush2.msra.mxu0 0.0
    %789 = vmatprep.subr.mxu0 0.0
    %790 = vmatpush2.msra.mxu0 0.0
    %791 = vmatprep.subr.mxu0 0.0
    %792 = vmatpush2.msra.mxu0 0.0
    %793 = vmatprep.subr.mxu0 0.0
    %794 = vmatpush2.msra.mxu0 0.0
    %795 = vmatprep.subr.mxu0 0.0
    %796 = vmatpush2.msra.mxu0 0.0
    %797 = vmatprep.subr.mxu0 0.0
    %798 = vmatpush2.msra.mxu0 0.0
    %799 = vmatprep.subr.mxu0 0.0
    %800 = vmatpush2.msra.mxu0 0.0
    %801 = vmatprep.subr.mxu0 0.0
    %802 = vmatpush2.msra.mxu0 0.0
    %803 = vmatprep.subr.mxu0 0.0
    %804 = vmatpush2.msra.mxu0 0.0
    %805 = vmatprep.subr.mxu0 0.0
    %806 = vmatpush2.msra.mxu0 0.0
    %807 = vmatprep.subr.mxu0 0.0
    %808 = vmatpush2.msra.mxu0 0.0
    %809 = vmatprep.subr.mxu0 0.0
    %810 = vmatpush2.msra.mxu0 0.0
    %811 = vmatprep.subr.mxu0 0.0
    %812 = vmatpush2.msra.mxu0 0.0
    %813 = vmatprep.mubr.f32.mxu0 0.0
    %814 = vmatmul.mubr.f32.gmra.mxu0 %v744
    %v815 = vpop.f32.mrf.mxu0
    %v816 = vadd.f32 %v151, %v815
    %v817 = vpop.f32.mrf.mxu0
    %818 = vmatprep.mubr.f32.mxu0 0.0
    %819 = vmatmul.mubr.f32.gmra.mxu0 %v747
    %v820 = vpop.f32.mrf.mxu0
    %v821 = vadd.f32 %v156, %v820
    %v822 = vpop.f32.mrf.mxu0
    %823 = vdwg.mxu0
    %v824 = vstv %s737
    %v825 = vmul.f32 %v824, %v160
    %v827 = vlaneseq
    %v828 = vshrl.u32 %v827, 7
    %v829 = vsub.s32 0, %v828
    %v830 = vrot.slane %v825, %v829
    %v832 = vadd.f32 %v816, %v830
    %v833 = vadd.f32 %v821, %v830
    %v834 = vmax.f32 %v832, 0.0
    %v835 = vmax.f32 %v833, 0.0
    %836 = vmatprep.subr.mxu0 0.0
    %837 = vmatpush1.msra.mxu0 %v176
    %838 = vmatprep.subr.mxu0 0.0
    %839 = vmatpush1.msra.mxu0 %v175
    %840 = vmatprep.subr.mxu0 0.0
    %841 = vmatpush1.msra.mxu0 %v174
    %842 = vmatprep.subr.mxu0 0.0
    %843 = vmatpush1.msra.mxu0 %v173
    %844 = vmatprep.subr.mxu0 0.0
    %845 = vmatpush1.msra.mxu0 %v172
    %846 = vmatprep.subr.mxu0 0.0
    %847 = vmatpush1.msra.mxu0 %v171
    %848 = vmatprep.subr.mxu0 0.0
    %849 = vmatpush1.msra.mxu0 %v170
    %850 = vmatprep.subr.mxu0 0.0
    %851 = vmatpush1.msra.mxu0 %v169
    %852 = vmatprep.subr.mxu0 0.0
    %853 = vmatpush1.msra.mxu0 %v168
    %854 = vmatprep.subr.mxu0 0.0
    %855 = vmatpush1.msra.mxu0 %v167
    %856 = vmatprep.subr.mxu0 0.0
    %857 = vmatpush1.msra.mxu0 %v166
    %858 = vmatprep.subr.mxu0 0.0
    %859 = vmatpush1.msra.mxu0 %v165
    %860 = vmatprep.subr.mxu0 0.0
    %861 = vmatpush1.msra.mxu0 %v164
    %862 = vmatprep.subr.mxu0 0.0
    %863 = vmatpush1.msra.mxu0 %v163
    %864 = vmatprep.subr.mxu0 0.0
    %865 = vmatpush1.msra.mxu0 %v162
    %866 = vmatprep.subr.mxu0 0.0
    %867 = vmatpush1.msra.mxu0 %v161
    %868 = vmatprep.subr.mxu0 0.0
    %869 = vmatpush2.msra.mxu0 0.0
    %870 = vmatprep.subr.mxu0 0.0
    %871 = vmatpush2.msra.mxu0 0.0
    %872 = vmatprep.subr.mxu0 0.0
    %873 = vmatpush2.msra.mxu0 0.0
    %874 = vmatprep.subr.mxu0 0.0
    %875 = vmatpush2.msra.mxu0 0.0
    %876 = vmatprep.subr.mxu0 0.0
    %877 = vmatpush2.msra.mxu0 0.0
    %878 = vmatprep.subr.mxu0 0.0
    %879 = vmatpush2.msra.mxu0 0.0
    %880 = vmatprep.subr.mxu0 0.0
    %881 = vmatpush2.msra.mxu0 0.0
    %882 = vmatprep.subr.mxu0 0.0
    %883 = vmatpush2.msra.mxu0 0.0
    %884 = vmatprep.subr.mxu0 0.0
    %885 = vmatpush2.msra.mxu0 0.0
    %886 = vmatprep.subr.mxu0 0.0
    %887 = vmatpush2.msra.mxu0 0.0
    %888 = vmatprep.subr.mxu0 0.0
    %889 = vmatpush2.msra.mxu0 0.0
    %890 = vmatprep.subr.mxu0 0.0
    %891 = vmatpush2.msra.mxu0 0.0
    %892 = vmatprep.subr.mxu0 0.0
    %893 = vmatpush2.msra.mxu0 0.0
    %894 = vmatprep.subr.mxu0 0.0
    %895 = vmatpush2.msra.mxu0 0.0
    %896 = vmatprep.subr.mxu0 0.0
    %897 = vmatpush2.msra.mxu0 0.0
    %898 = vmatprep.subr.mxu0 0.0
    %899 = vmatpush2.msra.mxu0 0.0
    %900 = vmatprep.mubr.f32.mxu0 0.0
    %901 = vmatmul.mubr.f32.gmra.mxu0 %v834
    %v902 = vpop.f32.mrf.mxu0
    %v903 = vadd.f32 %v285, %v902
    %v904 = vpop.f32.mrf.mxu0
    %905 = vmatprep.mubr.f32.mxu0 0.0
    %906 = vmatmul.mubr.f32.gmra.mxu0 %v835
    %v907 = vpop.f32.mrf.mxu0
    %v908 = vadd.f32 %v285, %v907
    %v909 = vpop.f32.mrf.mxu0
    %910 = vdwg.mxu0
    %v911 = vstv %s738
    %v912 = vmul.f32 %v911, %v734
    %v913 = vmul.f32 %v911, %v735
    %v914 = vstv %s739
    %v915 = vmul.f32 %v914, %v903
    %v916 = vmul.f32 %v914, %v908
    %v917 = vsub.f32 %v912, %v915
    %v918 = vsub.f32 %v913, %v916
    %s919 = sld [smem:[#allocation2 + $0x10]]
    %s920 = sld [smem:[#allocation2 + $0x11]]
    %s921 = sld [smem:[#allocation2 + $0x12]]
    %s922 = sld [smem:[#allocation2 + $0x13]]
    %v923 = vstv %s919
    %v924 = vmul.f32 %v917, %v923
    %v925 = vmul.f32 %v918, %v923
    %v927 = vsel %vm187, %v924, 0
    %v930 = vsel %vm187, %v925, 0
    %932 = vmatprep.subr.mxu0 0.0
    %933 = vmatpush1.msra.mxu0 0.0
    %934 = vmatprep.subr.mxu0 0.0
    %935 = vmatpush1.msra.mxu0 0.0
    %936 = vmatprep.subr.mxu0 0.0
    %937 = vmatpush1.msra.mxu0 0.0
    %938 = vmatprep.subr.mxu0 0.0
    %939 = vmatpush1.msra.mxu0 0.0
    %940 = vmatprep.subr.mxu0 0.0
    %941 = vmatpush1.msra.mxu0 0.0
    %942 = vmatprep.subr.mxu0 0.0
    %943 = vmatpush1.msra.mxu0 0.0
    %944 = vmatprep.subr.mxu0 0.0
    %945 = vmatpush1.msra.mxu0 0.0
    %946 = vmatprep.subr.mxu0 0.0
    %947 = vmatpush1.msra.mxu0 0.0
    %948 = vmatprep.subr.mxu0 0.0
    %949 = vmatpush1.msra.mxu0 0.0
    %950 = vmatprep.subr.mxu0 0.0
    %951 = vmatpush1.msra.mxu0 0.0
    %952 = vmatprep.subr.mxu0 0.0
    %953 = vmatpush1.msra.mxu0 0.0
    %954 = vmatprep.subr.mxu0 0.0
    %955 = vmatpush1.msra.mxu0 0.0
    %956 = vmatprep.subr.mxu0 0.0
    %957 = vmatpush1.msra.mxu0 0.0
    %958 = vmatprep.subr.mxu0 0.0
    %959 = vmatpush1.msra.mxu0 0.0
    %960 = vmatprep.subr.mxu0 0.0
    %961 = vmatpush1.msra.mxu0 0.0
    %962 = vmatprep.subr.mxu0 0.0
    %963 = vmatpush1.msra.mxu0 %v159
    %964 = vmatprep.subr.mxu0 0.0
    %965 = vmatpush2.msra.mxu0 0.0
    %966 = vmatprep.subr.mxu0 0.0
    %967 = vmatpush2.msra.mxu0 0.0
    %968 = vmatprep.subr.mxu0 0.0
    %969 = vmatpush2.msra.mxu0 0.0
    %970 = vmatprep.subr.mxu0 0.0
    %971 = vmatpush2.msra.mxu0 0.0
    %972 = vmatprep.subr.mxu0 0.0
    %973 = vmatpush2.msra.mxu0 0.0
    %974 = vmatprep.subr.mxu0 0.0
    %975 = vmatpush2.msra.mxu0 0.0
    %976 = vmatprep.subr.mxu0 0.0
    %977 = vmatpush2.msra.mxu0 0.0
    %978 = vmatprep.subr.mxu0 0.0
    %979 = vmatpush2.msra.mxu0 0.0
    %980 = vmatprep.subr.mxu0 0.0
    %981 = vmatpush2.msra.mxu0 0.0
    %982 = vmatprep.subr.mxu0 0.0
    %983 = vmatpush2.msra.mxu0 0.0
    %984 = vmatprep.subr.mxu0 0.0
    %985 = vmatpush2.msra.mxu0 0.0
    %986 = vmatprep.subr.mxu0 0.0
    %987 = vmatpush2.msra.mxu0 0.0
    %988 = vmatprep.subr.mxu0 0.0
    %989 = vmatpush2.msra.mxu0 0.0
    %990 = vmatprep.subr.mxu0 0.0
    %991 = vmatpush2.msra.mxu0 0.0
    %992 = vmatprep.subr.mxu0 0.0
    %993 = vmatpush2.msra.mxu0 0.0
    %994 = vmatprep.subr.mxu0 0.0
    %995 = vmatpush2.msra.mxu0 0.0
    %996 = vmatprep.mubr.f32.mxu0 0.0
    %997 = vmatmul.mubr.f32.gmra.mxu0 %v927
    %v998 = vpop.f32.mrf.mxu0
    %v999 = vadd.f32 %v151, %v998
    %v1000 = vpop.f32.mrf.mxu0
    %1001 = vmatprep.mubr.f32.mxu0 0.0
    %1002 = vmatmul.mubr.f32.gmra.mxu0 %v930
    %v1003 = vpop.f32.mrf.mxu0
    %v1004 = vadd.f32 %v156, %v1003
    %v1005 = vpop.f32.mrf.mxu0
    %1006 = vdwg.mxu0
    %v1007 = vstv %s920
    %v1008 = vmul.f32 %v1007, %v160
    %v1010 = vlaneseq
    %v1011 = vshrl.u32 %v1010, 7
    %v1012 = vsub.s32 0, %v1011
    %v1013 = vrot.slane %v1008, %v1012
    %v1015 = vadd.f32 %v999, %v1013
    %v1016 = vadd.f32 %v1004, %v1013
    %v1017 = vmax.f32 %v1015, 0.0
    %v1018 = vmax.f32 %v1016, 0.0
    %1019 = vmatprep.subr.mxu0 0.0
    %1020 = vmatpush1.msra.mxu0 %v176
    %1021 = vmatprep.subr.mxu0 0.0
    %1022 = vmatpush1.msra.mxu0 %v175
    %1023 = vmatprep.subr.mxu0 0.0
    %1024 = vmatpush1.msra.mxu0 %v174
    %1025 = vmatprep.subr.mxu0 0.0
    %1026 = vmatpush1.msra.mxu0 %v173
    %1027 = vmatprep.subr.mxu0 0.0
    %1028 = vmatpush1.msra.mxu0 %v172
    %1029 = vmatprep.subr.mxu0 0.0
    %1030 = vmatpush1.msra.mxu0 %v171
    %1031 = vmatprep.subr.mxu0 0.0
    %1032 = vmatpush1.msra.mxu0 %v170
    %1033 = vmatprep.subr.mxu0 0.0
    %1034 = vmatpush1.msra.mxu0 %v169
    %1035 = vmatprep.subr.mxu0 0.0
    %1036 = vmatpush1.msra.mxu0 %v168
    %1037 = vmatprep.subr.mxu0 0.0
    %1038 = vmatpush1.msra.mxu0 %v167
    %1039 = vmatprep.subr.mxu0 0.0
    %1040 = vmatpush1.msra.mxu0 %v166
    %1041 = vmatprep.subr.mxu0 0.0
    %1042 = vmatpush1.msra.mxu0 %v165
    %1043 = vmatprep.subr.mxu0 0.0
    %1044 = vmatpush1.msra.mxu0 %v164
    %1045 = vmatprep.subr.mxu0 0.0
    %1046 = vmatpush1.msra.mxu0 %v163
    %1047 = vmatprep.subr.mxu0 0.0
    %1048 = vmatpush1.msra.mxu0 %v162
    %1049 = vmatprep.subr.mxu0 0.0
    %1050 = vmatpush1.msra.mxu0 %v161
    %1051 = vmatprep.subr.mxu0 0.0
    %1052 = vmatpush2.msra.mxu0 0.0
    %1053 = vmatprep.subr.mxu0 0.0
    %1054 = vmatpush2.msra.mxu0 0.0
    %1055 = vmatprep.subr.mxu0 0.0
    %1056 = vmatpush2.msra.mxu0 0.0
    %1057 = vmatprep.subr.mxu0 0.0
    %1058 = vmatpush2.msra.mxu0 0.0
    %1059 = vmatprep.subr.mxu0 0.0
    %1060 = vmatpush2.msra.mxu0 0.0
    %1061 = vmatprep.subr.mxu0 0.0
    %1062 = vmatpush2.msra.mxu0 0.0
    %1063 = vmatprep.subr.mxu0 0.0
    %1064 = vmatpush2.msra.mxu0 0.0
    %1065 = vmatprep.subr.mxu0 0.0
    %1066 = vmatpush2.msra.mxu0 0.0
    %1067 = vmatprep.subr.mxu0 0.0
    %1068 = vmatpush2.msra.mxu0 0.0
    %1069 = vmatprep.subr.mxu0 0.0
    %1070 = vmatpush2.msra.mxu0 0.0
    %1071 = vmatprep.subr.mxu0 0.0
    %1072 = vmatpush2.msra.mxu0 0.0
    %1073 = vmatprep.subr.mxu0 0.0
    %1074 = vmatpush2.msra.mxu0 0.0
    %1075 = vmatprep.subr.mxu0 0.0
    %1076 = vmatpush2.msra.mxu0 0.0
    %1077 = vmatprep.subr.mxu0 0.0
    %1078 = vmatpush2.msra.mxu0 0.0
    %1079 = vmatprep.subr.mxu0 0.0
    %1080 = vmatpush2.msra.mxu0 0.0
    %1081 = vmatprep.subr.mxu0 0.0
    %1082 = vmatpush2.msra.mxu0 0.0
    %1083 = vmatprep.mubr.f32.mxu0 0.0
    %1084 = vmatmul.mubr.f32.gmra.mxu0 %v1017
    %v1085 = vpop.f32.mrf.mxu0
    %v1086 = vadd.f32 %v285, %v1085
    %v1087 = vpop.f32.mrf.mxu0
    %1088 = vmatprep.mubr.f32.mxu0 0.0
    %1089 = vmatmul.mubr.f32.gmra.mxu0 %v1018
    %v1090 = vpop.f32.mrf.mxu0
    %v1091 = vadd.f32 %v285, %v1090
    %v1092 = vpop.f32.mrf.mxu0
    %1093 = vdwg.mxu0
    %v1094 = vstv %s921
    %v1095 = vmul.f32 %v1094, %v917
    %v1096 = vmul.f32 %v1094, %v918
    %v1097 = vstv %s922
    %v1098 = vmul.f32 %v1097, %v1086
    %v1099 = vmul.f32 %v1097, %v1091
    %v1100 = vsub.f32 %v1095, %v1098
    %v1101 = vsub.f32 %v1096, %v1099
    %s1102 = sld [smem:[#allocation2 + $0x14]]
    %s1103 = sld [smem:[#allocation2 + $0x15]]
    %s1104 = sld [smem:[#allocation2 + $0x16]]
    %s1105 = sld [smem:[#allocation2 + $0x17]]
    %v1106 = vstv %s1102
    %v1107 = vmul.f32 %v1100, %v1106
    %v1108 = vmul.f32 %v1101, %v1106
    %v1110 = vsel %vm187, %v1107, 0
    %v1113 = vsel %vm187, %v1108, 0
    %1115 = vmatprep.subr.mxu0 0.0
    %1116 = vmatpush1.msra.mxu0 0.0
    %1117 = vmatprep.subr.mxu0 0.0
    %1118 = vmatpush1.msra.mxu0 0.0
    %1119 = vmatprep.subr.mxu0 0.0
    %1120 = vmatpush1.msra.mxu0 0.0
    %1121 = vmatprep.subr.mxu0 0.0
    %1122 = vmatpush1.msra.mxu0 0.0
    %1123 = vmatprep.subr.mxu0 0.0
    %1124 = vmatpush1.msra.mxu0 0.0
    %1125 = vmatprep.subr.mxu0 0.0
    %1126 = vmatpush1.msra.mxu0 0.0
    %1127 = vmatprep.subr.mxu0 0.0
    %1128 = vmatpush1.msra.mxu0 0.0
    %1129 = vmatprep.subr.mxu0 0.0
    %1130 = vmatpush1.msra.mxu0 0.0
    %1131 = vmatprep.subr.mxu0 0.0
    %1132 = vmatpush1.msra.mxu0 0.0
    %1133 = vmatprep.subr.mxu0 0.0
    %1134 = vmatpush1.msra.mxu0 0.0
    %1135 = vmatprep.subr.mxu0 0.0
    %1136 = vmatpush1.msra.mxu0 0.0
    %1137 = vmatprep.subr.mxu0 0.0
    %1138 = vmatpush1.msra.mxu0 0.0
    %1139 = vmatprep.subr.mxu0 0.0
    %1140 = vmatpush1.msra.mxu0 0.0
    %1141 = vmatprep.subr.mxu0 0.0
    %1142 = vmatpush1.msra.mxu0 0.0
    %1143 = vmatprep.subr.mxu0 0.0
    %1144 = vmatpush1.msra.mxu0 0.0
    %1145 = vmatprep.subr.mxu0 0.0
    %1146 = vmatpush1.msra.mxu0 %v159
    %1147 = vmatprep.subr.mxu0 0.0
    %1148 = vmatpush2.msra.mxu0 0.0
    %1149 = vmatprep.subr.mxu0 0.0
    %1150 = vmatpush2.msra.mxu0 0.0
    %1151 = vmatprep.subr.mxu0 0.0
    %1152 = vmatpush2.msra.mxu0 0.0
    %1153 = vmatprep.subr.mxu0 0.0
    %1154 = vmatpush2.msra.mxu0 0.0
    %1155 = vmatprep.subr.mxu0 0.0
    %1156 = vmatpush2.msra.mxu0 0.0
    %1157 = vmatprep.subr.mxu0 0.0
    %1158 = vmatpush2.msra.mxu0 0.0
    %1159 = vmatprep.subr.mxu0 0.0
    %1160 = vmatpush2.msra.mxu0 0.0
    %1161 = vmatprep.subr.mxu0 0.0
    %1162 = vmatpush2.msra.mxu0 0.0
    %1163 = vmatprep.subr.mxu0 0.0
    %1164 = vmatpush2.msra.mxu0 0.0
    %1165 = vmatprep.subr.mxu0 0.0
    %1166 = vmatpush2.msra.mxu0 0.0
    %1167 = vmatprep.subr.mxu0 0.0
    %1168 = vmatpush2.msra.mxu0 0.0
    %1169 = vmatprep.subr.mxu0 0.0
    %1170 = vmatpush2.msra.mxu0 0.0
    %1171 = vmatprep.subr.mxu0 0.0
    %1172 = vmatpush2.msra.mxu0 0.0
    %1173 = vmatprep.subr.mxu0 0.0
    %1174 = vmatpush2.msra.mxu0 0.0
    %1175 = vmatprep.subr.mxu0 0.0
    %1176 = vmatpush2.msra.mxu0 0.0
    %1177 = vmatprep.subr.mxu0 0.0
    %1178 = vmatpush2.msra.mxu0 0.0
    %1179 = vmatprep.mubr.f32.mxu0 0.0
    %1180 = vmatmul.mubr.f32.gmra.mxu0 %v1110
    %v1181 = vpop.f32.mrf.mxu0
    %v1182 = vadd.f32 %v151, %v1181
    %v1183 = vpop.f32.mrf.mxu0
    %1184 = vmatprep.mubr.f32.mxu0 0.0
    %1185 = vmatmul.mubr.f32.gmra.mxu0 %v1113
    %v1186 = vpop.f32.mrf.mxu0
    %v1187 = vadd.f32 %v156, %v1186
    %v1188 = vpop.f32.mrf.mxu0
    %1189 = vdwg.mxu0
    %v1190 = vstv %s1103
    %v1191 = vmul.f32 %v1190, %v160
    %v1193 = vlaneseq
    %v1194 = vshrl.u32 %v1193, 7
    %v1195 = vsub.s32 0, %v1194
    %v1196 = vrot.slane %v1191, %v1195
    %v1198 = vadd.f32 %v1182, %v1196
    %v1199 = vadd.f32 %v1187, %v1196
    %v1200 = vmax.f32 %v1198, 0.0
    %v1201 = vmax.f32 %v1199, 0.0
    %1202 = vmatprep.subr.mxu0 0.0
    %1203 = vmatpush1.msra.mxu0 %v176
    %1204 = vmatprep.subr.mxu0 0.0
    %1205 = vmatpush1.msra.mxu0 %v175
    %1206 = vmatprep.subr.mxu0 0.0
    %1207 = vmatpush1.msra.mxu0 %v174
    %1208 = vmatprep.subr.mxu0 0.0
    %1209 = vmatpush1.msra.mxu0 %v173
    %1210 = vmatprep.subr.mxu0 0.0
    %1211 = vmatpush1.msra.mxu0 %v172
    %1212 = vmatprep.subr.mxu0 0.0
    %1213 = vmatpush1.msra.mxu0 %v171
    %1214 = vmatprep.subr.mxu0 0.0
    %1215 = vmatpush1.msra.mxu0 %v170
    %1216 = vmatprep.subr.mxu0 0.0
    %1217 = vmatpush1.msra.mxu0 %v169
    %1218 = vmatprep.subr.mxu0 0.0
    %1219 = vmatpush1.msra.mxu0 %v168
    %1220 = vmatprep.subr.mxu0 0.0
    %1221 = vmatpush1.msra.mxu0 %v167
    %1222 = vmatprep.subr.mxu0 0.0
    %1223 = vmatpush1.msra.mxu0 %v166
    %1224 = vmatprep.subr.mxu0 0.0
    %1225 = vmatpush1.msra.mxu0 %v165
    %1226 = vmatprep.subr.mxu0 0.0
    %1227 = vmatpush1.msra.mxu0 %v164
    %1228 = vmatprep.subr.mxu0 0.0
    %1229 = vmatpush1.msra.mxu0 %v163
    %1230 = vmatprep.subr.mxu0 0.0
    %1231 = vmatpush1.msra.mxu0 %v162
    %1232 = vmatprep.subr.mxu0 0.0
    %1233 = vmatpush1.msra.mxu0 %v161
    %1234 = vmatprep.subr.mxu0 0.0
    %1235 = vmatpush2.msra.mxu0 0.0
    %1236 = vmatprep.subr.mxu0 0.0
    %1237 = vmatpush2.msra.mxu0 0.0
    %1238 = vmatprep.subr.mxu0 0.0
    %1239 = vmatpush2.msra.mxu0 0.0
    %1240 = vmatprep.subr.mxu0 0.0
    %1241 = vmatpush2.msra.mxu0 0.0
    %1242 = vmatprep.subr.mxu0 0.0
    %1243 = vmatpush2.msra.mxu0 0.0
    %1244 = vmatprep.subr.mxu0 0.0
    %1245 = vmatpush2.msra.mxu0 0.0
    %1246 = vmatprep.subr.mxu0 0.0
    %1247 = vmatpush2.msra.mxu0 0.0
    %1248 = vmatprep.subr.mxu0 0.0
    %1249 = vmatpush2.msra.mxu0 0.0
    %1250 = vmatprep.subr.mxu0 0.0
    %1251 = vmatpush2.msra.mxu0 0.0
    %1252 = vmatprep.subr.mxu0 0.0
    %1253 = vmatpush2.msra.mxu0 0.0
    %1254 = vmatprep.subr.mxu0 0.0
    %1255 = vmatpush2.msra.mxu0 0.0
    %1256 = vmatprep.subr.mxu0 0.0
    %1257 = vmatpush2.msra.mxu0 0.0
    %1258 = vmatprep.subr.mxu0 0.0
    %1259 = vmatpush2.msra.mxu0 0.0
    %1260 = vmatprep.subr.mxu0 0.0
    %1261 = vmatpush2.msra.mxu0 0.0
    %1262 = vmatprep.subr.mxu0 0.0
    %1263 = vmatpush2.msra.mxu0 0.0
    %1264 = vmatprep.subr.mxu0 0.0
    %1265 = vmatpush2.msra.mxu0 0.0
    %1266 = vmatprep.mubr.f32.mxu0 0.0
    %1267 = vmatmul.mubr.f32.gmra.mxu0 %v1200
    %v1268 = vpop.f32.mrf.mxu0
    %v1269 = vadd.f32 %v285, %v1268
    %v1270 = vpop.f32.mrf.mxu0
    %1271 = vmatprep.mubr.f32.mxu0 0.0
    %1272 = vmatmul.mubr.f32.gmra.mxu0 %v1201
    %v1273 = vpop.f32.mrf.mxu0
    %v1274 = vadd.f32 %v285, %v1273
    %v1275 = vpop.f32.mrf.mxu0
    %1276 = vdwg.mxu0
    %v1277 = vstv %s1104
    %v1278 = vmul.f32 %v1277, %v1100
    %v1279 = vmul.f32 %v1277, %v1101
    %v1280 = vstv %s1105
    %v1281 = vmul.f32 %v1280, %v1269
    %v1282 = vmul.f32 %v1280, %v1274
    %v1283 = vsub.f32 %v1278, %v1281
    %v1284 = vsub.f32 %v1279, %v1282
    %s1285 = sld [smem:[#allocation2 + $0x18]]
    %s1286 = sld [smem:[#allocation2 + $0x19]]
    %s1287 = sld [smem:[#allocation2 + $0x1a]]
    %s1288 = sld [smem:[#allocation2 + $0x1b]]
    %v1289 = vstv %s1285
    %v1290 = vmul.f32 %v1283, %v1289
    %v1291 = vmul.f32 %v1284, %v1289
    %v1293 = vsel %vm187, %v1290, 0
    %v1296 = vsel %vm187, %v1291, 0
    %1298 = vmatprep.subr.mxu0 0.0
    %1299 = vmatpush1.msra.mxu0 0.0
    %1300 = vmatprep.subr.mxu0 0.0
    %1301 = vmatpush1.msra.mxu0 0.0
    %1302 = vmatprep.subr.mxu0 0.0
    %1303 = vmatpush1.msra.mxu0 0.0
    %1304 = vmatprep.subr.mxu0 0.0
    %1305 = vmatpush1.msra.mxu0 0.0
    %1306 = vmatprep.subr.mxu0 0.0
    %1307 = vmatpush1.msra.mxu0 0.0
    %1308 = vmatprep.subr.mxu0 0.0
    %1309 = vmatpush1.msra.mxu0 0.0
    %1310 = vmatprep.subr.mxu0 0.0
    %1311 = vmatpush1.msra.mxu0 0.0
    %1312 = vmatprep.subr.mxu0 0.0
    %1313 = vmatpush1.msra.mxu0 0.0
    %1314 = vmatprep.subr.mxu0 0.0
    %1315 = vmatpush1.msra.mxu0 0.0
    %1316 = vmatprep.subr.mxu0 0.0
    %1317 = vmatpush1.msra.mxu0 0.0
    %1318 = vmatprep.subr.mxu0 0.0
    %1319 = vmatpush1.msra.mxu0 0.0
    %1320 = vmatprep.subr.mxu0 0.0
    %1321 = vmatpush1.msra.mxu0 0.0
    %1322 = vmatprep.subr.mxu0 0.0
    %1323 = vmatpush1.msra.mxu0 0.0
    %1324 = vmatprep.subr.mxu0 0.0
    %1325 = vmatpush1.msra.mxu0 0.0
    %1326 = vmatprep.subr.mxu0 0.0
    %1327 = vmatpush1.msra.mxu0 0.0
    %1328 = vmatprep.subr.mxu0 0.0
    %1329 = vmatpush1.msra.mxu0 %v159
    %1330 = vmatprep.subr.mxu0 0.0
    %1331 = vmatpush2.msra.mxu0 0.0
    %1332 = vmatprep.subr.mxu0 0.0
    %1333 = vmatpush2.msra.mxu0 0.0
    %1334 = vmatprep.subr.mxu0 0.0
    %1335 = vmatpush2.msra.mxu0 0.0
    %1336 = vmatprep.subr.mxu0 0.0
    %1337 = vmatpush2.msra.mxu0 0.0
    %1338 = vmatprep.subr.mxu0 0.0
    %1339 = vmatpush2.msra.mxu0 0.0
    %1340 = vmatprep.subr.mxu0 0.0
    %1341 = vmatpush2.msra.mxu0 0.0
    %1342 = vmatprep.subr.mxu0 0.0
    %1343 = vmatpush2.msra.mxu0 0.0
    %1344 = vmatprep.subr.mxu0 0.0
    %1345 = vmatpush2.msra.mxu0 0.0
    %1346 = vmatprep.subr.mxu0 0.0
    %1347 = vmatpush2.msra.mxu0 0.0
    %1348 = vmatprep.subr.mxu0 0.0
    %1349 = vmatpush2.msra.mxu0 0.0
    %1350 = vmatprep.subr.mxu0 0.0
    %1351 = vmatpush2.msra.mxu0 0.0
    %1352 = vmatprep.subr.mxu0 0.0
    %1353 = vmatpush2.msra.mxu0 0.0
    %1354 = vmatprep.subr.mxu0 0.0
    %1355 = vmatpush2.msra.mxu0 0.0
    %1356 = vmatprep.subr.mxu0 0.0
    %1357 = vmatpush2.msra.mxu0 0.0
    %1358 = vmatprep.subr.mxu0 0.0
    %1359 = vmatpush2.msra.mxu0 0.0
    %1360 = vmatprep.subr.mxu0 0.0
    %1361 = vmatpush2.msra.mxu0 0.0
    %1362 = vmatprep.mubr.f32.mxu0 0.0
    %1363 = vmatmul.mubr.f32.gmra.mxu0 %v1293
    %v1364 = vpop.f32.mrf.mxu0
    %v1365 = vadd.f32 %v151, %v1364
    %v1366 = vpop.f32.mrf.mxu0
    %1367 = vmatprep.mubr.f32.mxu0 0.0
    %1368 = vmatmul.mubr.f32.gmra.mxu0 %v1296
    %v1369 = vpop.f32.mrf.mxu0
    %v1370 = vadd.f32 %v156, %v1369
    %v1371 = vpop.f32.mrf.mxu0
    %1372 = vdwg.mxu0
    %v1373 = vstv %s1286
    %v1374 = vmul.f32 %v1373, %v160
    %v1376 = vlaneseq
    %v1377 = vshrl.u32 %v1376, 7
    %v1378 = vsub.s32 0, %v1377
    %v1379 = vrot.slane %v1374, %v1378
    %v1381 = vadd.f32 %v1365, %v1379
    %v1382 = vadd.f32 %v1370, %v1379
    %v1383 = vmax.f32 %v1381, 0.0
    %v1384 = vmax.f32 %v1382, 0.0
    %1385 = vmatprep.subr.mxu0 0.0
    %1386 = vmatpush1.msra.mxu0 %v176
    %1387 = vmatprep.subr.mxu0 0.0
    %1388 = vmatpush1.msra.mxu0 %v175
    %1389 = vmatprep.subr.mxu0 0.0
    %1390 = vmatpush1.msra.mxu0 %v174
    %1391 = vmatprep.subr.mxu0 0.0
    %1392 = vmatpush1.msra.mxu0 %v173
    %1393 = vmatprep.subr.mxu0 0.0
    %1394 = vmatpush1.msra.mxu0 %v172
    %1395 = vmatprep.subr.mxu0 0.0
    %1396 = vmatpush1.msra.mxu0 %v171
    %1397 = vmatprep.subr.mxu0 0.0
    %1398 = vmatpush1.msra.mxu0 %v170
    %1399 = vmatprep.subr.mxu0 0.0
    %1400 = vmatpush1.msra.mxu0 %v169
    %1401 = vmatprep.subr.mxu0 0.0
    %1402 = vmatpush1.msra.mxu0 %v168
    %1403 = vmatprep.subr.mxu0 0.0
    %1404 = vmatpush1.msra.mxu0 %v167
    %1405 = vmatprep.subr.mxu0 0.0
    %1406 = vmatpush1.msra.mxu0 %v166
    %1407 = vmatprep.subr.mxu0 0.0
    %1408 = vmatpush1.msra.mxu0 %v165
    %1409 = vmatprep.subr.mxu0 0.0
    %1410 = vmatpush1.msra.mxu0 %v164
    %1411 = vmatprep.subr.mxu0 0.0
    %1412 = vmatpush1.msra.mxu0 %v163
    %1413 = vmatprep.subr.mxu0 0.0
    %1414 = vmatpush1.msra.mxu0 %v162
    %1415 = vmatprep.subr.mxu0 0.0
    %1416 = vmatpush1.msra.mxu0 %v161
    %1417 = vmatprep.subr.mxu0 0.0
    %1418 = vmatpush2.msra.mxu0 0.0
    %1419 = vmatprep.subr.mxu0 0.0
    %1420 = vmatpush2.msra.mxu0 0.0
    %1421 = vmatprep.subr.mxu0 0.0
    %1422 = vmatpush2.msra.mxu0 0.0
    %1423 = vmatprep.subr.mxu0 0.0
    %1424 = vmatpush2.msra.mxu0 0.0
    %1425 = vmatprep.subr.mxu0 0.0
    %1426 = vmatpush2.msra.mxu0 0.0
    %1427 = vmatprep.subr.mxu0 0.0
    %1428 = vmatpush2.msra.mxu0 0.0
    %1429 = vmatprep.subr.mxu0 0.0
    %1430 = vmatpush2.msra.mxu0 0.0
    %1431 = vmatprep.subr.mxu0 0.0
    %1432 = vmatpush2.msra.mxu0 0.0
    %1433 = vmatprep.subr.mxu0 0.0
    %1434 = vmatpush2.msra.mxu0 0.0
    %1435 = vmatprep.subr.mxu0 0.0
    %1436 = vmatpush2.msra.mxu0 0.0
    %1437 = vmatprep.subr.mxu0 0.0
    %1438 = vmatpush2.msra.mxu0 0.0
    %1439 = vmatprep.subr.mxu0 0.0
    %1440 = vmatpush2.msra.mxu0 0.0
    %1441 = vmatprep.subr.mxu0 0.0
    %1442 = vmatpush2.msra.mxu0 0.0
    %1443 = vmatprep.subr.mxu0 0.0
    %1444 = vmatpush2.msra.mxu0 0.0
    %1445 = vmatprep.subr.mxu0 0.0
    %1446 = vmatpush2.msra.mxu0 0.0
    %1447 = vmatprep.subr.mxu0 0.0
    %1448 = vmatpush2.msra.mxu0 0.0
    %1449 = vmatprep.mubr.f32.mxu0 0.0
    %1450 = vmatmul.mubr.f32.gmra.mxu0 %v1383
    %v1451 = vpop.f32.mrf.mxu0
    %v1452 = vadd.f32 %v285, %v1451
    %v1453 = vpop.f32.mrf.mxu0
    %1454 = vmatprep.mubr.f32.mxu0 0.0
    %1455 = vmatmul.mubr.f32.gmra.mxu0 %v1384
    %v1456 = vpop.f32.mrf.mxu0
    %v1457 = vadd.f32 %v285, %v1456
    %v1458 = vpop.f32.mrf.mxu0
    %1459 = vdwg.mxu0
    %v1460 = vstv %s1287
    %v1461 = vmul.f32 %v1460, %v1283
    %v1462 = vmul.f32 %v1460, %v1284
    %v1463 = vstv %s1288
    %v1464 = vmul.f32 %v1463, %v1452
    %v1465 = vmul.f32 %v1463, %v1457
    %v1466 = vsub.f32 %v1461, %v1464
    %v1467 = vsub.f32 %v1462, %v1465
    %s1468 = sld [smem:[#allocation2 + $0x1c]]
    %s1469 = sld [smem:[#allocation2 + $0x1d]]
    %s1470 = sld [smem:[#allocation2 + $0x1e]]
    %s1471 = sld [smem:[#allocation2 + $0x1f]]
    %v1472 = vstv %s1468
    %v1473 = vmul.f32 %v1466, %v1472
    %v1474 = vmul.f32 %v1467, %v1472
    %v1476 = vsel %vm187, %v1473, 0
    %v1479 = vsel %vm187, %v1474, 0
    %1481 = vmatprep.subr.mxu0 0.0
    %1482 = vmatpush1.msra.mxu0 0.0
    %1483 = vmatprep.subr.mxu0 0.0
    %1484 = vmatpush1.msra.mxu0 0.0
    %1485 = vmatprep.subr.mxu0 0.0
    %1486 = vmatpush1.msra.mxu0 0.0
    %1487 = vmatprep.subr.mxu0 0.0
    %1488 = vmatpush1.msra.mxu0 0.0
    %1489 = vmatprep.subr.mxu0 0.0
    %1490 = vmatpush1.msra.mxu0 0.0
    %1491 = vmatprep.subr.mxu0 0.0
    %1492 = vmatpush1.msra.mxu0 0.0
    %1493 = vmatprep.subr.mxu0 0.0
    %1494 = vmatpush1.msra.mxu0 0.0
    %1495 = vmatprep.subr.mxu0 0.0
    %1496 = vmatpush1.msra.mxu0 0.0
    %1497 = vmatprep.subr.mxu0 0.0
    %1498 = vmatpush1.msra.mxu0 0.0
    %1499 = vmatprep.subr.mxu0 0.0
    %1500 = vmatpush1.msra.mxu0 0.0
    %1501 = vmatprep.subr.mxu0 0.0
    %1502 = vmatpush1.msra.mxu0 0.0
    %1503 = vmatprep.subr.mxu0 0.0
    %1504 = vmatpush1.msra.mxu0 0.0
    %1505 = vmatprep.subr.mxu0 0.0
    %1506 = vmatpush1.msra.mxu0 0.0
    %1507 = vmatprep.subr.mxu0 0.0
    %1508 = vmatpush1.msra.mxu0 0.0
    %1509 = vmatprep.subr.mxu0 0.0
    %1510 = vmatpush1.msra.mxu0 0.0
    %1511 = vmatprep.subr.mxu0 0.0
    %1512 = vmatpush1.msra.mxu0 %v159
    %1513 = vmatprep.subr.mxu0 0.0
    %1514 = vmatpush2.msra.mxu0 0.0
    %1515 = vmatprep.subr.mxu0 0.0
    %1516 = vmatpush2.msra.mxu0 0.0
    %1517 = vmatprep.subr.mxu0 0.0
    %1518 = vmatpush2.msra.mxu0 0.0
    %1519 = vmatprep.subr.mxu0 0.0
    %1520 = vmatpush2.msra.mxu0 0.0
    %1521 = vmatprep.subr.mxu0 0.0
    %1522 = vmatpush2.msra.mxu0 0.0
    %1523 = vmatprep.subr.mxu0 0.0
    %1524 = vmatpush2.msra.mxu0 0.0
    %1525 = vmatprep.subr.mxu0 0.0
    %1526 = vmatpush2.msra.mxu0 0.0
    %1527 = vmatprep.subr.mxu0 0.0
    %1528 = vmatpush2.msra.mxu0 0.0
    %1529 = vmatprep.subr.mxu0 0.0
    %1530 = vmatpush2.msra.mxu0 0.0
    %1531 = vmatprep.subr.mxu0 0.0
    %1532 = vmatpush2.msra.mxu0 0.0
    %1533 = vmatprep.subr.mxu0 0.0
    %1534 = vmatpush2.msra.mxu0 0.0
    %1535 = vmatprep.subr.mxu0 0.0
    %1536 = vmatpush2.msra.mxu0 0.0
    %1537 = vmatprep.subr.mxu0 0.0
    %1538 = vmatpush2.msra.mxu0 0.0
    %1539 = vmatprep.subr.mxu0 0.0
    %1540 = vmatpush2.msra.mxu0 0.0
    %1541 = vmatprep.subr.mxu0 0.0
    %1542 = vmatpush2.msra.mxu0 0.0
    %1543 = vmatprep.subr.mxu0 0.0
    %1544 = vmatpush2.msra.mxu0 0.0
    %1545 = vmatprep.mubr.f32.mxu0 0.0
    %1546 = vmatmul.mubr.f32.gmra.mxu0 %v1476
    %v1547 = vpop.f32.mrf.mxu0
    %v1548 = vadd.f32 %v151, %v1547
    %v1549 = vpop.f32.mrf.mxu0
    %1550 = vmatprep.mubr.f32.mxu0 0.0
    %1551 = vmatmul.mubr.f32.gmra.mxu0 %v1479
    %v1552 = vpop.f32.mrf.mxu0
    %v1553 = vadd.f32 %v156, %v1552
    %v1554 = vpop.f32.mrf.mxu0
    %1555 = vdwg.mxu0
    %v1556 = vstv %s1469
    %v1557 = vmul.f32 %v1556, %v160
    %v1559 = vlaneseq
    %v1560 = vshrl.u32 %v1559, 7
    %v1561 = vsub.s32 0, %v1560
    %v1562 = vrot.slane %v1557, %v1561
    %v1564 = vadd.f32 %v1548, %v1562
    %v1565 = vadd.f32 %v1553, %v1562
    %v1566 = vmax.f32 %v1564, 0.0
    %v1567 = vmax.f32 %v1565, 0.0
    %1568 = vmatprep.subr.mxu0 0.0
    %1569 = vmatpush1.msra.mxu0 %v176
    %1570 = vmatprep.subr.mxu0 0.0
    %1571 = vmatpush1.msra.mxu0 %v175
    %1572 = vmatprep.subr.mxu0 0.0
    %1573 = vmatpush1.msra.mxu0 %v174
    %1574 = vmatprep.subr.mxu0 0.0
    %1575 = vmatpush1.msra.mxu0 %v173
    %1576 = vmatprep.subr.mxu0 0.0
    %1577 = vmatpush1.msra.mxu0 %v172
    %1578 = vmatprep.subr.mxu0 0.0
    %1579 = vmatpush1.msra.mxu0 %v171
    %1580 = vmatprep.subr.mxu0 0.0
    %1581 = vmatpush1.msra.mxu0 %v170
    %1582 = vmatprep.subr.mxu0 0.0
    %1583 = vmatpush1.msra.mxu0 %v169
    %1584 = vmatprep.subr.mxu0 0.0
    %1585 = vmatpush1.msra.mxu0 %v168
    %1586 = vmatprep.subr.mxu0 0.0
    %1587 = vmatpush1.msra.mxu0 %v167
    %1588 = vmatprep.subr.mxu0 0.0
    %1589 = vmatpush1.msra.mxu0 %v166
    %1590 = vmatprep.subr.mxu0 0.0
    %1591 = vmatpush1.msra.mxu0 %v165
    %1592 = vmatprep.subr.mxu0 0.0
    %1593 = vmatpush1.msra.mxu0 %v164
    %1594 = vmatprep.subr.mxu0 0.0
    %1595 = vmatpush1.msra.mxu0 %v163
    %1596 = vmatprep.subr.mxu0 0.0
    %1597 = vmatpush1.msra.mxu0 %v162
    %1598 = vmatprep.subr.mxu0 0.0
    %1599 = vmatpush1.msra.mxu0 %v161
    %1600 = vmatprep.subr.mxu0 0.0
    %1601 = vmatpush2.msra.mxu0 0.0
    %1602 = vmatprep.subr.mxu0 0.0
    %1603 = vmatpush2.msra.mxu0 0.0
    %1604 = vmatprep.subr.mxu0 0.0
    %1605 = vmatpush2.msra.mxu0 0.0
    %1606 = vmatprep.subr.mxu0 0.0
    %1607 = vmatpush2.msra.mxu0 0.0
    %1608 = vmatprep.subr.mxu0 0.0
    %1609 = vmatpush2.msra.mxu0 0.0
    %1610 = vmatprep.subr.mxu0 0.0
    %1611 = vmatpush2.msra.mxu0 0.0
    %1612 = vmatprep.subr.mxu0 0.0
    %1613 = vmatpush2.msra.mxu0 0.0
    %1614 = vmatprep.subr.mxu0 0.0
    %1615 = vmatpush2.msra.mxu0 0.0
    %1616 = vmatprep.subr.mxu0 0.0
    %1617 = vmatpush2.msra.mxu0 0.0
    %1618 = vmatprep.subr.mxu0 0.0
    %1619 = vmatpush2.msra.mxu0 0.0
    %1620 = vmatprep.subr.mxu0 0.0
    %1621 = vmatpush2.msra.mxu0 0.0
    %1622 = vmatprep.subr.mxu0 0.0
    %1623 = vmatpush2.msra.mxu0 0.0
    %1624 = vmatprep.subr.mxu0 0.0
    %1625 = vmatpush2.msra.mxu0 0.0
    %1626 = vmatprep.subr.mxu0 0.0
    %1627 = vmatpush2.msra.mxu0 0.0
    %1628 = vmatprep.subr.mxu0 0.0
    %1629 = vmatpush2.msra.mxu0 0.0
    %1630 = vmatprep.subr.mxu0 0.0
    %1631 = vmatpush2.msra.mxu0 0.0
    %1632 = vmatprep.mubr.f32.mxu0 0.0
    %1633 = vmatmul.mubr.f32.gmra.mxu0 %v1566
    %v1634 = vpop.f32.mrf.mxu0
    %v1635 = vadd.f32 %v285, %v1634
    %v1636 = vpop.f32.mrf.mxu0
    %1637 = vmatprep.mubr.f32.mxu0 0.0
    %1638 = vmatmul.mubr.f32.gmra.mxu0 %v1567
    %v1639 = vpop.f32.mrf.mxu0
    %v1640 = vadd.f32 %v285, %v1639
    %v1641 = vpop.f32.mrf.mxu0
    %1642 = vdwg.mxu0
    %v1643 = vstv %s1470
    %v1644 = vmul.f32 %v1643, %v1466
    %v1645 = vmul.f32 %v1643, %v1467
    %v1646 = vstv %s1471
    %v1647 = vmul.f32 %v1646, %v1635
    %v1648 = vmul.f32 %v1646, %v1640
    %v1649 = vsub.f32 %v1644, %v1647
    %v1650 = vsub.f32 %v1645, %v1648
    %s1651 = sld [smem:[#allocation2 + $0x20]]
    %s1652 = sld [smem:[#allocation2 + $0x21]]
    %s1653 = sld [smem:[#allocation2 + $0x22]]
    %s1654 = sld [smem:[#allocation2 + $0x23]]
    %v1655 = vstv %s1651
    %v1656 = vmul.f32 %v1649, %v1655
    %v1657 = vmul.f32 %v1650, %v1655
    %v1659 = vsel %vm187, %v1656, 0
    %v1662 = vsel %vm187, %v1657, 0
    %1664 = vmatprep.subr.mxu0 0.0
    %1665 = vmatpush1.msra.mxu0 0.0
    %1666 = vmatprep.subr.mxu0 0.0
    %1667 = vmatpush1.msra.mxu0 0.0
    %1668 = vmatprep.subr.mxu0 0.0
    %1669 = vmatpush1.msra.mxu0 0.0
    %1670 = vmatprep.subr.mxu0 0.0
    %1671 = vmatpush1.msra.mxu0 0.0
    %1672 = vmatprep.subr.mxu0 0.0
    %1673 = vmatpush1.msra.mxu0 0.0
    %1674 = vmatprep.subr.mxu0 0.0
    %1675 = vmatpush1.msra.mxu0 0.0
    %1676 = vmatprep.subr.mxu0 0.0
    %1677 = vmatpush1.msra.mxu0 0.0
    %1678 = vmatprep.subr.mxu0 0.0
    %1679 = vmatpush1.msra.mxu0 0.0
    %1680 = vmatprep.subr.mxu0 0.0
    %1681 = vmatpush1.msra.mxu0 0.0
    %1682 = vmatprep.subr.mxu0 0.0
    %1683 = vmatpush1.msra.mxu0 0.0
    %1684 = vmatprep.subr.mxu0 0.0
    %1685 = vmatpush1.msra.mxu0 0.0
    %1686 = vmatprep.subr.mxu0 0.0
    %1687 = vmatpush1.msra.mxu0 0.0
    %1688 = vmatprep.subr.mxu0 0.0
    %1689 = vmatpush1.msra.mxu0 0.0
    %1690 = vmatprep.subr.mxu0 0.0
    %1691 = vmatpush1.msra.mxu0 0.0
    %1692 = vmatprep.subr.mxu0 0.0
    %1693 = vmatpush1.msra.mxu0 0.0
    %1694 = vmatprep.subr.mxu0 0.0
    %1695 = vmatpush1.msra.mxu0 %v159
    %1696 = vmatprep.subr.mxu0 0.0
    %1697 = vmatpush2.msra.mxu0 0.0
    %1698 = vmatprep.subr.mxu0 0.0
    %1699 = vmatpush2.msra.mxu0 0.0
    %1700 = vmatprep.subr.mxu0 0.0
    %1701 = vmatpush2.msra.mxu0 0.0
    %1702 = vmatprep.subr.mxu0 0.0
    %1703 = vmatpush2.msra.mxu0 0.0
    %1704 = vmatprep.subr.mxu0 0.0
    %1705 = vmatpush2.msra.mxu0 0.0
    %1706 = vmatprep.subr.mxu0 0.0
    %1707 = vmatpush2.msra.mxu0 0.0
    %1708 = vmatprep.subr.mxu0 0.0
    %1709 = vmatpush2.msra.mxu0 0.0
    %1710 = vmatprep.subr.mxu0 0.0
    %1711 = vmatpush2.msra.mxu0 0.0
    %1712 = vmatprep.subr.mxu0 0.0
    %1713 = vmatpush2.msra.mxu0 0.0
    %1714 = vmatprep.subr.mxu0 0.0
    %1715 = vmatpush2.msra.mxu0 0.0
    %1716 = vmatprep.subr.mxu0 0.0
    %1717 = vmatpush2.msra.mxu0 0.0
    %1718 = vmatprep.subr.mxu0 0.0
    %1719 = vmatpush2.msra.mxu0 0.0
    %1720 = vmatprep.subr.mxu0 0.0
    %1721 = vmatpush2.msra.mxu0 0.0
    %1722 = vmatprep.subr.mxu0 0.0
    %1723 = vmatpush2.msra.mxu0 0.0
    %1724 = vmatprep.subr.mxu0 0.0
    %1725 = vmatpush2.msra.mxu0 0.0
    %1726 = vmatprep.subr.mxu0 0.0
    %1727 = vmatpush2.msra.mxu0 0.0
    %1728 = vmatprep.mubr.f32.mxu0 0.0
    %1729 = vmatmul.mubr.f32.gmra.mxu0 %v1659
    %v1730 = vpop.f32.mrf.mxu0
    %v1731 = vadd.f32 %v151, %v1730
    %v1732 = vpop.f32.mrf.mxu0
    %1733 = vmatprep.mubr.f32.mxu0 0.0
    %1734 = vmatmul.mubr.f32.gmra.mxu0 %v1662
    %v1735 = vpop.f32.mrf.mxu0
    %v1736 = vadd.f32 %v156, %v1735
    %v1737 = vpop.f32.mrf.mxu0
    %1738 = vdwg.mxu0
    %v1739 = vstv %s1652
    %v1740 = vmul.f32 %v1739, %v160
    %v1742 = vlaneseq
    %v1743 = vshrl.u32 %v1742, 7
    %v1744 = vsub.s32 0, %v1743
    %v1745 = vrot.slane %v1740, %v1744
    %v1747 = vadd.f32 %v1731, %v1745
    %v1748 = vadd.f32 %v1736, %v1745
    %v1749 = vmax.f32 %v1747, 0.0
    %v1750 = vmax.f32 %v1748, 0.0
    %1751 = vmatprep.subr.mxu0 0.0
    %1752 = vmatpush1.msra.mxu0 %v176
    %1753 = vmatprep.subr.mxu0 0.0
    %1754 = vmatpush1.msra.mxu0 %v175
    %1755 = vmatprep.subr.mxu0 0.0
    %1756 = vmatpush1.msra.mxu0 %v174
    %1757 = vmatprep.subr.mxu0 0.0
    %1758 = vmatpush1.msra.mxu0 %v173
    %1759 = vmatprep.subr.mxu0 0.0
    %1760 = vmatpush1.msra.mxu0 %v172
    %1761 = vmatprep.subr.mxu0 0.0
    %1762 = vmatpush1.msra.mxu0 %v171
    %1763 = vmatprep.subr.mxu0 0.0
    %1764 = vmatpush1.msra.mxu0 %v170
    %1765 = vmatprep.subr.mxu0 0.0
    %1766 = vmatpush1.msra.mxu0 %v169
    %1767 = vmatprep.subr.mxu0 0.0
    %1768 = vmatpush1.msra.mxu0 %v168
    %1769 = vmatprep.subr.mxu0 0.0
    %1770 = vmatpush1.msra.mxu0 %v167
    %1771 = vmatprep.subr.mxu0 0.0
    %1772 = vmatpush1.msra.mxu0 %v166
    %1773 = vmatprep.subr.mxu0 0.0
    %1774 = vmatpush1.msra.mxu0 %v165
    %1775 = vmatprep.subr.mxu0 0.0
    %1776 = vmatpush1.msra.mxu0 %v164
    %1777 = vmatprep.subr.mxu0 0.0
    %1778 = vmatpush1.msra.mxu0 %v163
    %1779 = vmatprep.subr.mxu0 0.0
    %1780 = vmatpush1.msra.mxu0 %v162
    %1781 = vmatprep.subr.mxu0 0.0
    %1782 = vmatpush1.msra.mxu0 %v161
    %1783 = vmatprep.subr.mxu0 0.0
    %1784 = vmatpush2.msra.mxu0 0.0
    %1785 = vmatprep.subr.mxu0 0.0
    %1786 = vmatpush2.msra.mxu0 0.0
    %1787 = vmatprep.subr.mxu0 0.0
    %1788 = vmatpush2.msra.mxu0 0.0
    %1789 = vmatprep.subr.mxu0 0.0
    %1790 = vmatpush2.msra.mxu0 0.0
    %1791 = vmatprep.subr.mxu0 0.0
    %1792 = vmatpush2.msra.mxu0 0.0
    %1793 = vmatprep.subr.mxu0 0.0
    %1794 = vmatpush2.msra.mxu0 0.0
    %1795 = vmatprep.subr.mxu0 0.0
    %1796 = vmatpush2.msra.mxu0 0.0
    %1797 = vmatprep.subr.mxu0 0.0
    %1798 = vmatpush2.msra.mxu0 0.0
    %1799 = vmatprep.subr.mxu0 0.0
    %1800 = vmatpush2.msra.mxu0 0.0
    %1801 = vmatprep.subr.mxu0 0.0
    %1802 = vmatpush2.msra.mxu0 0.0
    %1803 = vmatprep.subr.mxu0 0.0
    %1804 = vmatpush2.msra.mxu0 0.0
    %1805 = vmatprep.subr.mxu0 0.0
    %1806 = vmatpush2.msra.mxu0 0.0
    %1807 = vmatprep.subr.mxu0 0.0
    %1808 = vmatpush2.msra.mxu0 0.0
    %1809 = vmatprep.subr.mxu0 0.0
    %1810 = vmatpush2.msra.mxu0 0.0
    %1811 = vmatprep.subr.mxu0 0.0
    %1812 = vmatpush2.msra.mxu0 0.0
    %1813 = vmatprep.subr.mxu0 0.0
    %1814 = vmatpush2.msra.mxu0 0.0
    %1815 = vmatprep.mubr.f32.mxu0 0.0
    %1816 = vmatmul.mubr.f32.gmra.mxu0 %v1749
    %v1817 = vpop.f32.mrf.mxu0
    %v1818 = vadd.f32 %v285, %v1817
    %v1819 = vpop.f32.mrf.mxu0
    %1820 = vmatprep.mubr.f32.mxu0 0.0
    %1821 = vmatmul.mubr.f32.gmra.mxu0 %v1750
    %v1822 = vpop.f32.mrf.mxu0
    %v1823 = vadd.f32 %v285, %v1822
    %v1824 = vpop.f32.mrf.mxu0
    %1825 = vdwg.mxu0
    %v1826 = vstv %s1653
    %v1827 = vmul.f32 %v1826, %v1649
    %v1828 = vmul.f32 %v1826, %v1650
    %v1829 = vstv %s1654
    %v1830 = vmul.f32 %v1829, %v1818
    %v1831 = vmul.f32 %v1829, %v1823
    %v1832 = vsub.f32 %v1827, %v1830
    %v1833 = vsub.f32 %v1828, %v1831
    %s1834 = sld [smem:[#allocation2 + $0x24]]
    %s1835 = sld [smem:[#allocation2 + $0x25]]
    %s1836 = sld [smem:[#allocation2 + $0x26]]
    %s1837 = sld [smem:[#allocation2 + $0x27]]
    %v1838 = vstv %s1834
    %v1839 = vmul.f32 %v1832, %v1838
    %v1840 = vmul.f32 %v1833, %v1838
    %v1842 = vsel %vm187, %v1839, 0
    %v1845 = vsel %vm187, %v1840, 0
    %1847 = vmatprep.subr.mxu0 0.0
    %1848 = vmatpush1.msra.mxu0 0.0
    %1849 = vmatprep.subr.mxu0 0.0
    %1850 = vmatpush1.msra.mxu0 0.0
    %1851 = vmatprep.subr.mxu0 0.0
    %1852 = vmatpush1.msra.mxu0 0.0
    %1853 = vmatprep.subr.mxu0 0.0
    %1854 = vmatpush1.msra.mxu0 0.0
    %1855 = vmatprep.subr.mxu0 0.0
    %1856 = vmatpush1.msra.mxu0 0.0
    %1857 = vmatprep.subr.mxu0 0.0
    %1858 = vmatpush1.msra.mxu0 0.0
    %1859 = vmatprep.subr.mxu0 0.0
    %1860 = vmatpush1.msra.mxu0 0.0
    %1861 = vmatprep.subr.mxu0 0.0
    %1862 = vmatpush1.msra.mxu0 0.0
    %1863 = vmatprep.subr.mxu0 0.0
    %1864 = vmatpush1.msra.mxu0 0.0
    %1865 = vmatprep.subr.mxu0 0.0
    %1866 = vmatpush1.msra.mxu0 0.0
    %1867 = vmatprep.subr.mxu0 0.0
    %1868 = vmatpush1.msra.mxu0 0.0
    %1869 = vmatprep.subr.mxu0 0.0
    %1870 = vmatpush1.msra.mxu0 0.0
    %1871 = vmatprep.subr.mxu0 0.0
    %1872 = vmatpush1.msra.mxu0 0.0
    %1873 = vmatprep.subr.mxu0 0.0
    %1874 = vmatpush1.msra.mxu0 0.0
    %1875 = vmatprep.subr.mxu0 0.0
    %1876 = vmatpush1.msra.mxu0 0.0
    %1877 = vmatprep.subr.mxu0 0.0
    %1878 = vmatpush1.msra.mxu0 %v159
    %1879 = vmatprep.subr.mxu0 0.0
    %1880 = vmatpush2.msra.mxu0 0.0
    %1881 = vmatprep.subr.mxu0 0.0
    %1882 = vmatpush2.msra.mxu0 0.0
    %1883 = vmatprep.subr.mxu0 0.0
    %1884 = vmatpush2.msra.mxu0 0.0
    %1885 = vmatprep.subr.mxu0 0.0
    %1886 = vmatpush2.msra.mxu0 0.0
    %1887 = vmatprep.subr.mxu0 0.0
    %1888 = vmatpush2.msra.mxu0 0.0
    %1889 = vmatprep.subr.mxu0 0.0
    %1890 = vmatpush2.msra.mxu0 0.0
    %1891 = vmatprep.subr.mxu0 0.0
    %1892 = vmatpush2.msra.mxu0 0.0
    %1893 = vmatprep.subr.mxu0 0.0
    %1894 = vmatpush2.msra.mxu0 0.0
    %1895 = vmatprep.subr.mxu0 0.0
    %1896 = vmatpush2.msra.mxu0 0.0
    %1897 = vmatprep.subr.mxu0 0.0
    %1898 = vmatpush2.msra.mxu0 0.0
    %1899 = vmatprep.subr.mxu0 0.0
    %1900 = vmatpush2.msra.mxu0 0.0
    %1901 = vmatprep.subr.mxu0 0.0
    %1902 = vmatpush2.msra.mxu0 0.0
    %1903 = vmatprep.subr.mxu0 0.0
    %1904 = vmatpush2.msra.mxu0 0.0
    %1905 = vmatprep.subr.mxu0 0.0
    %1906 = vmatpush2.msra.mxu0 0.0
    %1907 = vmatprep.subr.mxu0 0.0
    %1908 = vmatpush2.msra.mxu0 0.0
    %1909 = vmatprep.subr.mxu0 0.0
    %1910 = vmatpush2.msra.mxu0 0.0
    %1911 = vmatprep.mubr.f32.mxu0 0.0
    %1912 = vmatmul.mubr.f32.gmra.mxu0 %v1842
    %v1913 = vpop.f32.mrf.mxu0
    %v1914 = vadd.f32 %v151, %v1913
    %v1915 = vpop.f32.mrf.mxu0
    %1916 = vmatprep.mubr.f32.mxu0 0.0
    %1917 = vmatmul.mubr.f32.gmra.mxu0 %v1845
    %v1918 = vpop.f32.mrf.mxu0
    %v1919 = vadd.f32 %v156, %v1918
    %v1920 = vpop.f32.mrf.mxu0
    %1921 = vdwg.mxu0
    %v1922 = vstv %s1835
    %v1923 = vmul.f32 %v1922, %v160
    %v1925 = vlaneseq
    %v1926 = vshrl.u32 %v1925, 7
    %v1927 = vsub.s32 0, %v1926
    %v1928 = vrot.slane %v1923, %v1927
    %v1930 = vadd.f32 %v1914, %v1928
    %v1931 = vadd.f32 %v1919, %v1928
    %v1932 = vmax.f32 %v1930, 0.0
    %v1933 = vmax.f32 %v1931, 0.0
    %1934 = vmatprep.subr.mxu0 0.0
    %1935 = vmatpush1.msra.mxu0 %v176
    %1936 = vmatprep.subr.mxu0 0.0
    %1937 = vmatpush1.msra.mxu0 %v175
    %1938 = vmatprep.subr.mxu0 0.0
    %1939 = vmatpush1.msra.mxu0 %v174
    %1940 = vmatprep.subr.mxu0 0.0
    %1941 = vmatpush1.msra.mxu0 %v173
    %1942 = vmatprep.subr.mxu0 0.0
    %1943 = vmatpush1.msra.mxu0 %v172
    %1944 = vmatprep.subr.mxu0 0.0
    %1945 = vmatpush1.msra.mxu0 %v171
    %1946 = vmatprep.subr.mxu0 0.0
    %1947 = vmatpush1.msra.mxu0 %v170
    %1948 = vmatprep.subr.mxu0 0.0
    %1949 = vmatpush1.msra.mxu0 %v169
    %1950 = vmatprep.subr.mxu0 0.0
    %1951 = vmatpush1.msra.mxu0 %v168
    %1952 = vmatprep.subr.mxu0 0.0
    %1953 = vmatpush1.msra.mxu0 %v167
    %1954 = vmatprep.subr.mxu0 0.0
    %1955 = vmatpush1.msra.mxu0 %v166
    %1956 = vmatprep.subr.mxu0 0.0
    %1957 = vmatpush1.msra.mxu0 %v165
    %1958 = vmatprep.subr.mxu0 0.0
    %1959 = vmatpush1.msra.mxu0 %v164
    %1960 = vmatprep.subr.mxu0 0.0
    %1961 = vmatpush1.msra.mxu0 %v163
    %1962 = vmatprep.subr.mxu0 0.0
    %1963 = vmatpush1.msra.mxu0 %v162
    %1964 = vmatprep.subr.mxu0 0.0
    %1965 = vmatpush1.msra.mxu0 %v161
    %1966 = vmatprep.subr.mxu0 0.0
    %1967 = vmatpush2.msra.mxu0 0.0
    %1968 = vmatprep.subr.mxu0 0.0
    %1969 = vmatpush2.msra.mxu0 0.0
    %1970 = vmatprep.subr.mxu0 0.0
    %1971 = vmatpush2.msra.mxu0 0.0
    %1972 = vmatprep.subr.mxu0 0.0
    %1973 = vmatpush2.msra.mxu0 0.0
    %1974 = vmatprep.subr.mxu0 0.0
    %1975 = vmatpush2.msra.mxu0 0.0
    %1976 = vmatprep.subr.mxu0 0.0
    %1977 = vmatpush2.msra.mxu0 0.0
    %1978 = vmatprep.subr.mxu0 0.0
    %1979 = vmatpush2.msra.mxu0 0.0
    %1980 = vmatprep.subr.mxu0 0.0
    %1981 = vmatpush2.msra.mxu0 0.0
    %1982 = vmatprep.subr.mxu0 0.0
    %1983 = vmatpush2.msra.mxu0 0.0
    %1984 = vmatprep.subr.mxu0 0.0
    %1985 = vmatpush2.msra.mxu0 0.0
    %1986 = vmatprep.subr.mxu0 0.0
    %1987 = vmatpush2.msra.mxu0 0.0
    %1988 = vmatprep.subr.mxu0 0.0
    %1989 = vmatpush2.msra.mxu0 0.0
    %1990 = vmatprep.subr.mxu0 0.0
    %1991 = vmatpush2.msra.mxu0 0.0
    %1992 = vmatprep.subr.mxu0 0.0
    %1993 = vmatpush2.msra.mxu0 0.0
    %1994 = vmatprep.subr.mxu0 0.0
    %1995 = vmatpush2.msra.mxu0 0.0
    %1996 = vmatprep.subr.mxu0 0.0
    %1997 = vmatpush2.msra.mxu0 0.0
    %1998 = vmatprep.mubr.f32.mxu0 0.0
    %1999 = vmatmul.mubr.f32.gmra.mxu0 %v1932
    %v2000 = vpop.f32.mrf.mxu0
    %v2001 = vadd.f32 %v285, %v2000
    %v2002 = vpop.f32.mrf.mxu0
    %2003 = vmatprep.mubr.f32.mxu0 0.0
    %2004 = vmatmul.mubr.f32.gmra.mxu0 %v1933
    %v2005 = vpop.f32.mrf.mxu0
    %v2006 = vadd.f32 %v285, %v2005
    %v2007 = vpop.f32.mrf.mxu0
    %2008 = vdwg.mxu0
    %v2009 = vstv %s1836
    %v2010 = vmul.f32 %v2009, %v1832
    %v2011 = vmul.f32 %v2009, %v1833
    %v2012 = vstv %s1837
    %v2013 = vmul.f32 %v2012, %v2001
    %v2014 = vmul.f32 %v2012, %v2006
    %v2015 = vsub.f32 %v2010, %v2013
    %v2016 = vsub.f32 %v2011, %v2014
    %2017 = vst.msk [vmem:[#allocation7] sm:$0xff] %vm187, %v2015
    %2018 = vst.msk [vmem:[#allocation7 + $0x8] sm:$0xff] %vm187, %v2016
    // Predicated region
    $region46: #{diffusion_decoder_forward.1} parent=1 // pred_check
      _
    $region47: #{diffusion_decoder_forward.1} parent=1 // pred_check_branch
      %2020 = sbr.rel (0) target = $region49
    $region48: #{diffusion_decoder_forward.1} parent=1 // pred_region
      %s2022 = ssub.s32 256, 256
      %2023 = vsyncadd [#allocation4], %s2022
      %s2024 = sshll.u32 [#allocation7], 4
      %s2025 = int_to_ptr.vmem [resolvable:$true] %s2024
      %2030 = dma.vmem_to_hbm [thread:$0]  %s2025, 256, %s9, [#allocation4], 128, 128, 8
    $region49: #{diffusion_decoder_forward.1} parent=1 // pred_fallthru
      _
    // Predicated region
    $region50: #{diffusion_decoder_forward.1} parent=1 // pred_check
      _
    $region51: #{diffusion_decoder_forward.1} parent=1 // pred_check_branch
      %2032 = sbr.rel (0) target = $region53
    $region52: #{diffusion_decoder_forward.1} parent=1 // pred_region
      %2033 = dma.done [#allocation4], 256
    $region53: #{diffusion_decoder_forward.1} parent=1 // pred_fallthru
      _
    %2034 = vsyncpa [#allocation3], 1
    %2035 = vsyncpa [#allocation4], 1
    %2036 = vsyncpa [#allocation5], 1

</llo_original>
